<compile_context>
chip_gen: v5e
topology: v5e:2x2
jax: 0.10.0
libtpu: 0.0.40
codegen_flags: <defaults>
</compile_context>

<pallas_src>
import functools

import jax
import jax.numpy as jnp
import numpy as np
from jax.experimental import pallas as pl
from jax.experimental.pallas import tpu as pltpu

LN_EPS = 1e-5
NEG_BIG = 1e9


# ----------------------------- kernel-side math -------------------------------
def _layer_norm(v, g, b):
    # one-pass variance: E[x^2] - mu^2  (single cross-lane reduction pair)
    mu = jnp.mean(v, axis=-1, keepdims=True)
    var = jnp.mean(v * v, axis=-1, keepdims=True) - mu * mu
    return (v - mu) * jax.lax.rsqrt(var + LN_EPS) * g + b


def _split_heads(t, n_heads):
    """(S, H*dh) f32 -> (H, S, dh) bf16."""
    s, d = t.shape
    dh = d // n_heads
    return jnp.transpose(t.reshape(s, n_heads, dh), (1, 0, 2)).astype(jnp.bfloat16)


def _attention(q, k, v, bias, n_heads):
    """q:(Sq,D), k/v:(Sk,D) already projected (f32); bias:(Sq,Sk) additive mask.

    Returns (Sq, D) f32 (pre output-projection).
    """
    sq, d = q.shape
    dh = d // n_heads
    qh = _split_heads(q, n_heads)
    kh = _split_heads(k, n_heads)
    vh = _split_heads(v, n_heads)
    # batched head contraction on the MXU, f32 accumulation
    s = jnp.einsum('hqd,hkd->hqk', qh, kh,
                   preferred_element_type=jnp.float32) * (dh ** -0.5)
    s = s + bias[None, :, :]
    s = s - jnp.max(s, axis=-1, keepdims=True)
    p = jnp.exp(s)
    p = p * pl.reciprocal(jnp.sum(p, axis=-1, keepdims=True), approx=True)
    o = jnp.einsum('hqk,hkd->hqd', p.astype(jnp.bfloat16), vh,
                   preferred_element_type=jnp.float32)
    return jnp.transpose(o, (1, 0, 2)).reshape(sq, d)


# ------------------------------- kernel ---------------------------------------
def _decoder_layer_kernel(n_heads,
                          x_ref, enc_ref, tgt_m_ref, src_m_ref, ln_ref,
                          wqkv_s_ref, bqkv_s_ref, wo_s_ref, bo_s_ref,
                          wq_c_ref, bq_c_ref, wkv_c_ref, bkv_c_ref,
                          wo_c_ref, bo_c_ref,
                          w1_ref, b1_ref, w2_ref, b2_ref,
                          o_ref):
    x = x_ref[0]                         # (S, D) f32
    d = x.shape[-1]

    # --- sublayer 1: pre-LN masked self-attention + residual (dropout = id) ---
    h = _layer_norm(x, ln_ref[0], ln_ref[1]).astype(jnp.bfloat16)
    qkv = jnp.dot(h, wqkv_s_ref[...],
                  preferred_element_type=jnp.float32) + bqkv_s_ref[0]
    bias = (tgt_m_ref[0] - 1.0) * NEG_BIG          # 0 where attend, -1e9 blocked
    attn = _attention(qkv[:, :d], qkv[:, d:2 * d], qkv[:, 2 * d:], bias, n_heads)
    x = x + (jnp.dot(attn.astype(jnp.bfloat16), wo_s_ref[...],
                     preferred_element_type=jnp.float32) + bo_s_ref[0])

    # --- sublayer 2: pre-LN cross-attention (Q: decoder, K/V: raw encoder) ---
    h = _layer_norm(x, ln_ref[2], ln_ref[3]).astype(jnp.bfloat16)
    q = jnp.dot(h, wq_c_ref[...], preferred_element_type=jnp.float32) + bq_c_ref[0]
    kv = jnp.dot(enc_ref[0].astype(jnp.bfloat16), wkv_c_ref[...],
                 preferred_element_type=jnp.float32) + bkv_c_ref[0]
    bias = (src_m_ref[0] - 1.0) * NEG_BIG
    attn = _attention(q, kv[:, :d], kv[:, d:], bias, n_heads)
    x = x + (jnp.dot(attn.astype(jnp.bfloat16), wo_c_ref[...],
                     preferred_element_type=jnp.float32) + bo_c_ref[0])

    # --- sublayer 3: pre-LN position-wise feed-forward ---
    h = _layer_norm(x, ln_ref[4], ln_ref[5]).astype(jnp.bfloat16)
    ff = jnp.maximum(jnp.dot(h, w1_ref[...],
                             preferred_element_type=jnp.float32) + b1_ref[0], 0.0)
    ff = jnp.dot(ff.astype(jnp.bfloat16), w2_ref[...],
                 preferred_element_type=jnp.float32) + b2_ref[0]
    x = x + ff

    o_ref[0] = x.astype(o_ref.dtype)


# ------------------------------- wrapper --------------------------------------
def decoder_layer(x, enc, src_mask, tgt_mask, params, n_heads):
    B, S, D = x.shape
    Se = enc.shape[1]
    F = params["w1"].shape[1]
    aw, ab = params["attn_w"], params["attn_b"]
    cdt = jnp.bfloat16

    # Fused / packed weights in bf16 (MXU-native); biases and LN params stay f32.
    w_self_qkv = jnp.concatenate([aw[0], aw[1], aw[2]], axis=1).astype(cdt)  # (D,3D)
    b_self_qkv = jnp.concatenate([ab[0], ab[1], ab[2]])[None]                # (1,3D)
    w_self_o, b_self_o = aw[3].astype(cdt), ab[3][None]
    w_cross_q, b_cross_q = aw[4].astype(cdt), ab[4][None]
    w_cross_kv = jnp.concatenate([aw[5], aw[6]], axis=1).astype(cdt)         # (D,2D)
    b_cross_kv = jnp.concatenate([ab[5], ab[6]])[None]
    w_cross_o, b_cross_o = aw[7].astype(cdt), ab[7][None]
    w1, b1 = params["w1"].astype(cdt), params["b1"]
    w2, b2 = params["w2"].astype(cdt), params["b2"]
    ln = params["ln"]

    def full(shape):
        return pl.BlockSpec(shape, lambda b, _n=len(shape): (0,) * _n)

    def per_b(s1, s2):
        return pl.BlockSpec((1, s1, s2), lambda b: (b, 0, 0))

    flops = B * (2 * S * D * 3 * D + 4 * S * S * D + 2 * S * D * D        # self attn
                 + 2 * S * D * D + 4 * Se * D * D + 4 * S * Se * D        # cross attn
                 + 2 * S * D * D
                 + 4 * S * D * F)                                         # FFN
    transcendentals = B * n_heads * (S * S + S * Se)
    bytes_accessed = (4 * (2 * B * S * D + B * Se * D + B * S * S + B * S * Se)
                      + 2 * (3 * D * D + 4 * D * D + 2 * D * D + 2 * D * F))

    kernel = functools.partial(_decoder_layer_kernel, n_heads)
    return pl.pallas_call(
        kernel,
        out_shape=jax.ShapeDtypeStruct((B, S, D), x.dtype),
        grid_spec=pltpu.PrefetchScalarGridSpec(
            num_scalar_prefetch=0,
            grid=(B,),
            in_specs=[
                per_b(S, D),                         # x
                per_b(Se, D),                        # encoder output
                per_b(S, S),                         # tgt mask
                per_b(S, Se),                        # src mask
                full((6, D)),                        # LN gammas/betas
                full((D, 3 * D)), full((1, 3 * D)),  # self fused QKV
                full((D, D)), full((1, D)),          # self out proj
                full((D, D)), full((1, D)),          # cross Q
                full((D, 2 * D)), full((1, 2 * D)),  # cross fused KV
                full((D, D)), full((1, D)),          # cross out proj
                full((D, F)), full((1, F)),          # ffn w1 / b1
                full((F, D)), full((1, D)),          # ffn w2 / b2
            ],
            out_specs=pl.BlockSpec((1, S, D), lambda b: (b, 0, 0)),
        ),
        compiler_params=pltpu.CompilerParams(
            dimension_semantics=("parallel",),
            vmem_limit_bytes=64 * 1024 * 1024),
        cost_estimate=pl.CostEstimate(flops=flops,
                                      transcendentals=transcendentals,
                                      bytes_accessed=bytes_accessed),
    )(x, enc, tgt_mask, src_mask, ln,
      w_self_qkv, b_self_qkv, w_self_o, b_self_o,
      w_cross_q, b_cross_q, w_cross_kv, b_cross_kv, w_cross_o, b_cross_o,
      w1, b1, w2, b2)


# ---------------------------- pure-JAX reference ------------------------------
def _ln_ref(v, g, b):
    mu = jnp.mean(v, axis=-1, keepdims=True)
    var = jnp.mean((v - mu) ** 2, axis=-1, keepdims=True)
    return (v - mu) * jax.lax.rsqrt(var + LN_EPS) * g + b


def _mha_ref(q_in, kv_in, mask, wq, bq, wk, bk, wv, bv, wo, bo, n_heads):
    d_model = q_in.shape[-1]
    dh = d_model // n_heads
    scale = 1.0 / (dh ** 0.5)
    q = q_in @ wq + bq
    k = kv_in @ wk + bk
    v = kv_in @ wv + bv
    heads = []
    for h in range(n_heads):
        sl = slice(h * dh, (h + 1) * dh)
        s = (q[:, sl] @ k[:, sl].T) * scale
        s = jnp.where(mask > 0.5, s, -NEG_BIG)
        p = jax.nn.softmax(s, axis=-1)
        heads.append(p @ v[:, sl])
    return jnp.concatenate(heads, axis=-1) @ wo + bo


def reference(x, enc, src_mask, tgt_mask, params, n_heads):
    ln, aw, ab = params["ln"], params["attn_w"], params["attn_b"]

    def one(xb, eb, sm, tm):
        h = _ln_ref(xb, ln[0], ln[1])
        xb = xb + _mha_ref(h, h, tm, aw[0], ab[0], aw[1], ab[1],
                           aw[2], ab[2], aw[3], ab[3], n_heads)
        h = _ln_ref(xb, ln[2], ln[3])
        xb = xb + _mha_ref(h, eb, sm, aw[4], ab[4], aw[5], ab[5],
                           aw[6], ab[6], aw[7], ab[7], n_heads)
        h = _ln_ref(xb, ln[4], ln[5])
        ff = jnp.maximum(h @ params["w1"] + params["b1"][0], 0.0)
        return xb + ff @ params["w2"] + params["b2"][0]

    return jax.vmap(one)(x, enc, src_mask, tgt_mask)


# --------------------------------- main ----------------------------------------
if __name__ == "__main__":
    B, S, Se, D, F, H = 2, 8, 8, 32, 64, 4   # batch, dec seq, enc seq, d_model, dff, heads
    key = jax.random.PRNGKey(0)
    k_x, k_enc, k_params = jax.random.split(key, 3)

    x = jax.random.normal(k_x, (B, S, D), jnp.float32)
    enc = jax.random.normal(k_enc, (B, Se, D), jnp.float32)
    tgt_mask = jnp.broadcast_to(jnp.tril(jnp.ones((S, S), jnp.float32)), (B, S, S))
    src_mask = jnp.ones((B, S, Se), jnp.float32)

    def init_w(k, shape, scale=0.05):
        return scale * jax.random.normal(k, shape, jnp.float32)

    wk = jax.random.split(k_params, 6)
    params = {
        # ln: [g1, b1, g2, b2, g3, b3]
        "ln": jnp.stack([jnp.ones(D), jnp.zeros(D)] * 3).astype(jnp.float32),
        # attn_w: [Wq1, Wk1, Wv1, Wo1, Wq2, Wk2, Wv2, Wo2], each (D, D), applied as x @ W + b
        "attn_w": init_w(wk[0], (8, D, D)),
        "attn_b": init_w(wk[1], (8, D)),
        "w1": init_w(wk[2], (D, F)),
        "b1": init_w(wk[3], (1, F)),
        "w2": init_w(wk[4], (F, D)),
        "b2": init_w(wk[5], (1, D)),
    }

    out = decoder_layer(x, enc, src_mask, tgt_mask, params, H)
    out = jax.block_until_ready(out)

    ref = reference(x, enc, src_mask, tgt_mask, params, H)
    np.testing.assert_allclose(np.asarray(out), np.asarray(ref), atol=2e-2, rtol=2e-2)
    print("KERNEL_OK")
</pallas_src>

<mosaic_0001>
module attributes {stable_mosaic.version = 11 : i64} {
  func.func @_decoder_layer_kernel(%arg0: i32, %arg1: memref<1x8x32xf32, #tpu.memory_space<vmem>>, %arg2: memref<1x8x32xf32, #tpu.memory_space<vmem>>, %arg3: memref<1x8x8xf32, #tpu.memory_space<vmem>>, %arg4: memref<1x8x8xf32, #tpu.memory_space<vmem>>, %arg5: memref<6x32xf32, #tpu.memory_space<vmem>>, %arg6: memref<32x96xbf16, #tpu.memory_space<vmem>>, %arg7: memref<1x96xf32, #tpu.memory_space<vmem>>, %arg8: memref<32x32xbf16, #tpu.memory_space<vmem>>, %arg9: memref<1x32xf32, #tpu.memory_space<vmem>>, %arg10: memref<32x32xbf16, #tpu.memory_space<vmem>>, %arg11: memref<1x32xf32, #tpu.memory_space<vmem>>, %arg12: memref<32x64xbf16, #tpu.memory_space<vmem>>, %arg13: memref<1x64xf32, #tpu.memory_space<vmem>>, %arg14: memref<32x32xbf16, #tpu.memory_space<vmem>>, %arg15: memref<1x32xf32, #tpu.memory_space<vmem>>, %arg16: memref<32x64xbf16, #tpu.memory_space<vmem>>, %arg17: memref<1x64xf32, #tpu.memory_space<vmem>>, %arg18: memref<64x32xbf16, #tpu.memory_space<vmem>>, %arg19: memref<1x32xf32, #tpu.memory_space<vmem>>, %arg20: memref<1x8x32xf32, #tpu.memory_space<vmem>>) attributes {dimension_semantics = [#tpu.dimension_semantics<parallel>], iteration_bounds = array<i64: 2>, scalar_prefetch = 0 : i64, scratch_operands = 0 : i64, tpu.core_type = #tpu.core_type<tc>, window_params = [{transform_indices = @transform_0, window_bounds = array<i64: 1, 8, 32>}, {transform_indices = @transform_1, window_bounds = array<i64: 1, 8, 32>}, {transform_indices = @transform_2, window_bounds = array<i64: 1, 8, 8>}, {transform_indices = @transform_3, window_bounds = array<i64: 1, 8, 8>}, {pipeline_mode = #tpu.pipeline_mode<synchronous>, transform_indices = @transform_4, window_bounds = array<i64: 6, 32>}, {pipeline_mode = #tpu.pipeline_mode<synchronous>, transform_indices = @transform_5, window_bounds = array<i64: 32, 96>}, {pipeline_mode = #tpu.pipeline_mode<synchronous>, transform_indices = @transform_6, window_bounds = array<i64: 1, 96>}, {pipeline_mode = #tpu.pipeline_mode<synchronous>, transform_indices = @transform_7, window_bounds = array<i64: 32, 32>}, {pipeline_mode = #tpu.pipeline_mode<synchronous>, transform_indices = @transform_8, window_bounds = array<i64: 1, 32>}, {pipeline_mode = #tpu.pipeline_mode<synchronous>, transform_indices = @transform_9, window_bounds = array<i64: 32, 32>}, {pipeline_mode = #tpu.pipeline_mode<synchronous>, transform_indices = @transform_10, window_bounds = array<i64: 1, 32>}, {pipeline_mode = #tpu.pipeline_mode<synchronous>, transform_indices = @transform_11, window_bounds = array<i64: 32, 64>}, {pipeline_mode = #tpu.pipeline_mode<synchronous>, transform_indices = @transform_12, window_bounds = array<i64: 1, 64>}, {pipeline_mode = #tpu.pipeline_mode<synchronous>, transform_indices = @transform_13, window_bounds = array<i64: 32, 32>}, {pipeline_mode = #tpu.pipeline_mode<synchronous>, transform_indices = @transform_14, window_bounds = array<i64: 1, 32>}, {pipeline_mode = #tpu.pipeline_mode<synchronous>, transform_indices = @transform_15, window_bounds = array<i64: 32, 64>}, {pipeline_mode = #tpu.pipeline_mode<synchronous>, transform_indices = @transform_16, window_bounds = array<i64: 1, 64>}, {pipeline_mode = #tpu.pipeline_mode<synchronous>, transform_indices = @transform_17, window_bounds = array<i64: 64, 32>}, {pipeline_mode = #tpu.pipeline_mode<synchronous>, transform_indices = @transform_18, window_bounds = array<i64: 1, 32>}, {transform_indices = @transform_19, window_bounds = array<i64: 1, 8, 32>}]} {
    %c0 = arith.constant 0 : index
    %c0_0 = arith.constant 0 : index
    %c0_1 = arith.constant 0 : index
    %0 = vector.load %arg1[%c0, %c0_0, %c0_1] : memref<1x8x32xf32, #tpu.memory_space<vmem>>, vector<1x8x32xf32>
    %1 = vector.shape_cast %0 : vector<1x8x32xf32> to vector<8x32xf32>
    %c0_2 = arith.constant 0 : index
    %c0_3 = arith.constant 0 : index
    %2 = vector.load %arg5[%c0_2, %c0_3] : memref<6x32xf32, #tpu.memory_space<vmem>>, vector<1x32xf32>
    %3 = vector.shape_cast %2 : vector<1x32xf32> to vector<32xf32>
    %c1 = arith.constant 1 : index
    %c0_4 = arith.constant 0 : index
    %4 = vector.load %arg5[%c1, %c0_4] : memref<6x32xf32, #tpu.memory_space<vmem>>, vector<1x32xf32>
    %5 = vector.shape_cast %4 : vector<1x32xf32> to vector<32xf32>
    %cst = arith.constant dense<0.000000e+00> : vector<8xf32>
    %6 = vector.multi_reduction <add>, %1, %cst [1] : vector<8x32xf32> to vector<8xf32>
    %7 = vector.shape_cast %6 : vector<8xf32> to vector<8x1xf32>
    %cst_5 = arith.constant 3.200000e+01 : f32
    %8 = vector.broadcast %cst_5 : f32 to vector<8x1xf32>
    %9 = arith.divf %7, %8 : vector<8x1xf32>
    %10 = arith.mulf %1, %1 : vector<8x32xf32>
    %cst_6 = arith.constant dense<0.000000e+00> : vector<8xf32>
    %11 = vector.multi_reduction <add>, %10, %cst_6 [1] : vector<8x32xf32> to vector<8xf32>
    %12 = vector.shape_cast %11 : vector<8xf32> to vector<8x1xf32>
    %cst_7 = arith.constant 3.200000e+01 : f32
    %13 = vector.broadcast %cst_7 : f32 to vector<8x1xf32>
    %14 = arith.divf %12, %13 : vector<8x1xf32>
    %15 = arith.mulf %9, %9 : vector<8x1xf32>
    %16 = arith.subf %14, %15 : vector<8x1xf32>
    %17 = vector.broadcast %9 : vector<8x1xf32> to vector<8x32xf32>
    %18 = arith.subf %1, %17 : vector<8x32xf32>
    %cst_8 = arith.constant 9.99999974E-6 : f32
    %19 = vector.broadcast %cst_8 : f32 to vector<8x1xf32>
    %20 = arith.addf %16, %19 : vector<8x1xf32>
    %21 = math.rsqrt %20 : vector<8x1xf32>
    %22 = vector.broadcast %21 : vector<8x1xf32> to vector<8x32xf32>
    %23 = arith.mulf %18, %22 : vector<8x32xf32>
    %24 = vector.shape_cast %3 : vector<32xf32> to vector<1x32xf32>
    %25 = vector.broadcast %24 : vector<1x32xf32> to vector<8x32xf32>
    %26 = arith.mulf %23, %25 : vector<8x32xf32>
    %27 = vector.shape_cast %5 : vector<32xf32> to vector<1x32xf32>
    %28 = vector.broadcast %27 : vector<1x32xf32> to vector<8x32xf32>
    %29 = arith.addf %26, %28 : vector<8x32xf32>
    %30 = arith.truncf %29 : vector<8x32xf32> to vector<8x32xbf16>
    %c0_9 = arith.constant 0 : index
    %c0_10 = arith.constant 0 : index
    %31 = vector.load %arg6[%c0_9, %c0_10] : memref<32x96xbf16, #tpu.memory_space<vmem>>, vector<32x96xbf16>
    %cst_11 = arith.constant dense<0.000000e+00> : vector<8x96xf32>
    %32 = tpu.matmul %30, %31, %cst_11 {dimension_numbers = #tpu.dot_dimension_numbers<[1], [0], [0], [1], [0, 0, 1, 1], [], []>} : vector<8x32xbf16>, vector<32x96xbf16>, vector<8x96xf32> -> vector<8x96xf32>
    %c0_12 = arith.constant 0 : index
    %c0_13 = arith.constant 0 : index
    %33 = vector.load %arg7[%c0_12, %c0_13] : memref<1x96xf32, #tpu.memory_space<vmem>>, vector<1x96xf32>
    %34 = vector.shape_cast %33 : vector<1x96xf32> to vector<96xf32>
    %35 = vector.shape_cast %34 : vector<96xf32> to vector<1x96xf32>
    %36 = vector.broadcast %35 : vector<1x96xf32> to vector<8x96xf32>
    %37 = arith.addf %32, %36 : vector<8x96xf32>
    %c0_14 = arith.constant 0 : index
    %c0_15 = arith.constant 0 : index
    %c0_16 = arith.constant 0 : index
    %38 = vector.load %arg3[%c0_14, %c0_15, %c0_16] : memref<1x8x8xf32, #tpu.memory_space<vmem>>, vector<1x8x8xf32>
    %39 = vector.shape_cast %38 : vector<1x8x8xf32> to vector<8x8xf32>
    %cst_17 = arith.constant 1.000000e+00 : f32
    %40 = vector.broadcast %cst_17 : f32 to vector<8x8xf32>
    %41 = arith.subf %39, %40 : vector<8x8xf32>
    %cst_18 = arith.constant 1.000000e+09 : f32
    %42 = vector.broadcast %cst_18 : f32 to vector<8x8xf32>
    %43 = arith.mulf %41, %42 : vector<8x8xf32>
    %44 = vector.extract_strided_slice %37 {offsets = [0, 0], sizes = [8, 32], strides = [1, 1]} : vector<8x96xf32> to vector<8x32xf32>
    %45 = vector.extract_strided_slice %37 {offsets = [0, 32], sizes = [8, 32], strides = [1, 1]} : vector<8x96xf32> to vector<8x32xf32>
    %46 = vector.extract_strided_slice %37 {offsets = [0, 64], sizes = [8, 32], strides = [1, 1]} : vector<8x96xf32> to vector<8x32xf32>
    %47 = vector.shape_cast %44 : vector<8x32xf32> to vector<8x4x8xf32>
    %48 = tpu.transpose %47, [1, 0, 2] : vector<8x4x8xf32> -> vector<4x8x8xf32>
    %49 = arith.truncf %48 : vector<4x8x8xf32> to vector<4x8x8xbf16>
    %50 = vector.shape_cast %45 : vector<8x32xf32> to vector<8x4x8xf32>
    %51 = tpu.transpose %50, [1, 0, 2] : vector<8x4x8xf32> -> vector<4x8x8xf32>
    %52 = arith.truncf %51 : vector<4x8x8xf32> to vector<4x8x8xbf16>
    %53 = vector.shape_cast %46 : vector<8x32xf32> to vector<8x4x8xf32>
    %54 = tpu.transpose %53, [1, 0, 2] : vector<8x4x8xf32> -> vector<4x8x8xf32>
    %55 = arith.truncf %54 : vector<4x8x8xf32> to vector<4x8x8xbf16>
    "tpu.trace_start"() <{level = 10 : i32, message = "hqd,hkd->hqk"}> : () -> ()
    %cst_19 = arith.constant dense<0.000000e+00> : vector<4x8x8xf32>
    %56 = tpu.matmul %49, %52, %cst_19 {dimension_numbers = #tpu.dot_dimension_numbers<[2], [2], [1], [1], [0, 0, 0, 1, 1, 1], [0], [0]>} : vector<4x8x8xbf16>, vector<4x8x8xbf16>, vector<4x8x8xf32> -> vector<4x8x8xf32>
    "tpu.trace_stop"() : () -> ()
    %cst_20 = arith.constant 0.353553385 : f32
    %57 = vector.broadcast %cst_20 : f32 to vector<4x8x8xf32>
    %58 = arith.mulf %56, %57 : vector<4x8x8xf32>
    %59 = vector.shape_cast %43 : vector<8x8xf32> to vector<1x8x8xf32>
    %60 = vector.broadcast %59 : vector<1x8x8xf32> to vector<4x8x8xf32>
    %61 = arith.addf %58, %60 : vector<4x8x8xf32>
    %cst_21 = arith.constant dense<0xFF800000> : vector<4x8xf32>
    %62 = vector.multi_reduction <maximumf>, %61, %cst_21 [2] : vector<4x8x8xf32> to vector<4x8xf32>
    %63 = vector.shape_cast %62 : vector<4x8xf32> to vector<4x8x1xf32>
    %64 = vector.broadcast %63 : vector<4x8x1xf32> to vector<4x8x8xf32>
    %65 = arith.subf %61, %64 : vector<4x8x8xf32>
    %66 = math.exp %65 : vector<4x8x8xf32>
    %cst_22 = arith.constant dense<0.000000e+00> : vector<4x8xf32>
    %67 = vector.multi_reduction <add>, %66, %cst_22 [2] : vector<4x8x8xf32> to vector<4x8xf32>
    %68 = vector.shape_cast %67 : vector<4x8xf32> to vector<4x8x1xf32>
    %69 = tpu.reciprocal %68 {approx = true} : vector<4x8x1xf32> -> vector<4x8x1xf32>
    %70 = vector.broadcast %69 : vector<4x8x1xf32> to vector<4x8x8xf32>
    %71 = arith.mulf %66, %70 : vector<4x8x8xf32>
    %72 = arith.truncf %71 : vector<4x8x8xf32> to vector<4x8x8xbf16>
    "tpu.trace_start"() <{level = 10 : i32, message = "hqk,hkd->hqd"}> : () -> ()
    %cst_23 = arith.constant dense<0.000000e+00> : vector<4x8x8xf32>
    %73 = tpu.matmul %72, %55, %cst_23 {dimension_numbers = #tpu.dot_dimension_numbers<[2], [1], [1], [2], [0, 0, 0, 1, 1, 2], [0], [0]>} : vector<4x8x8xbf16>, vector<4x8x8xbf16>, vector<4x8x8xf32> -> vector<4x8x8xf32>
    "tpu.trace_stop"() : () -> ()
    %74 = tpu.transpose %73, [1, 0, 2] : vector<4x8x8xf32> -> vector<8x4x8xf32>
    %75 = vector.shape_cast %74 : vector<8x4x8xf32> to vector<8x32xf32>
    %76 = arith.truncf %75 : vector<8x32xf32> to vector<8x32xbf16>
    %c0_24 = arith.constant 0 : index
    %c0_25 = arith.constant 0 : index
    %77 = vector.load %arg8[%c0_24, %c0_25] : memref<32x32xbf16, #tpu.memory_space<vmem>>, vector<32x32xbf16>
    %cst_26 = arith.constant dense<0.000000e+00> : vector<8x32xf32>
    %78 = tpu.matmul %76, %77, %cst_26 {dimension_numbers = #tpu.dot_dimension_numbers<[1], [0], [0], [1], [0, 0, 1, 1], [], []>} : vector<8x32xbf16>, vector<32x32xbf16>, vector<8x32xf32> -> vector<8x32xf32>
    %c0_27 = arith.constant 0 : index
    %c0_28 = arith.constant 0 : index
    %79 = vector.load %arg9[%c0_27, %c0_28] : memref<1x32xf32, #tpu.memory_space<vmem>>, vector<1x32xf32>
    %80 = vector.shape_cast %79 : vector<1x32xf32> to vector<32xf32>
    %81 = vector.shape_cast %80 : vector<32xf32> to vector<1x32xf32>
    %82 = vector.broadcast %81 : vector<1x32xf32> to vector<8x32xf32>
    %83 = arith.addf %78, %82 : vector<8x32xf32>
    %84 = arith.addf %1, %83 : vector<8x32xf32>
    %c2 = arith.constant 2 : index
    %c0_29 = arith.constant 0 : index
    %85 = vector.load %arg5[%c2, %c0_29] : memref<6x32xf32, #tpu.memory_space<vmem>>, vector<1x32xf32>
    %86 = vector.shape_cast %85 : vector<1x32xf32> to vector<32xf32>
    %c3 = arith.constant 3 : index
    %c0_30 = arith.constant 0 : index
    %87 = vector.load %arg5[%c3, %c0_30] : memref<6x32xf32, #tpu.memory_space<vmem>>, vector<1x32xf32>
    %88 = vector.shape_cast %87 : vector<1x32xf32> to vector<32xf32>
    %cst_31 = arith.constant dense<0.000000e+00> : vector<8xf32>
    %89 = vector.multi_reduction <add>, %84, %cst_31 [1] : vector<8x32xf32> to vector<8xf32>
    %90 = vector.shape_cast %89 : vector<8xf32> to vector<8x1xf32>
    %cst_32 = arith.constant 3.200000e+01 : f32
    %91 = vector.broadcast %cst_32 : f32 to vector<8x1xf32>
    %92 = arith.divf %90, %91 : vector<8x1xf32>
    %93 = arith.mulf %84, %84 : vector<8x32xf32>
    %cst_33 = arith.constant dense<0.000000e+00> : vector<8xf32>
    %94 = vector.multi_reduction <add>, %93, %cst_33 [1] : vector<8x32xf32> to vector<8xf32>
    %95 = vector.shape_cast %94 : vector<8xf32> to vector<8x1xf32>
    %cst_34 = arith.constant 3.200000e+01 : f32
    %96 = vector.broadcast %cst_34 : f32 to vector<8x1xf32>
    %97 = arith.divf %95, %96 : vector<8x1xf32>
    %98 = arith.mulf %92, %92 : vector<8x1xf32>
    %99 = arith.subf %97, %98 : vector<8x1xf32>
    %100 = vector.broadcast %92 : vector<8x1xf32> to vector<8x32xf32>
    %101 = arith.subf %84, %100 : vector<8x32xf32>
    %cst_35 = arith.constant 9.99999974E-6 : f32
    %102 = vector.broadcast %cst_35 : f32 to vector<8x1xf32>
    %103 = arith.addf %99, %102 : vector<8x1xf32>
    %104 = math.rsqrt %103 : vector<8x1xf32>
    %105 = vector.broadcast %104 : vector<8x1xf32> to vector<8x32xf32>
    %106 = arith.mulf %101, %105 : vector<8x32xf32>
    %107 = vector.shape_cast %86 : vector<32xf32> to vector<1x32xf32>
    %108 = vector.broadcast %107 : vector<1x32xf32> to vector<8x32xf32>
    %109 = arith.mulf %106, %108 : vector<8x32xf32>
    %110 = vector.shape_cast %88 : vector<32xf32> to vector<1x32xf32>
    %111 = vector.broadcast %110 : vector<1x32xf32> to vector<8x32xf32>
    %112 = arith.addf %109, %111 : vector<8x32xf32>
    %113 = arith.truncf %112 : vector<8x32xf32> to vector<8x32xbf16>
    %c0_36 = arith.constant 0 : index
    %c0_37 = arith.constant 0 : index
    %114 = vector.load %arg10[%c0_36, %c0_37] : memref<32x32xbf16, #tpu.memory_space<vmem>>, vector<32x32xbf16>
    %cst_38 = arith.constant dense<0.000000e+00> : vector<8x32xf32>
    %115 = tpu.matmul %113, %114, %cst_38 {dimension_numbers = #tpu.dot_dimension_numbers<[1], [0], [0], [1], [0, 0, 1, 1], [], []>} : vector<8x32xbf16>, vector<32x32xbf16>, vector<8x32xf32> -> vector<8x32xf32>
    %c0_39 = arith.constant 0 : index
    %c0_40 = arith.constant 0 : index
    %116 = vector.load %arg11[%c0_39, %c0_40] : memref<1x32xf32, #tpu.memory_space<vmem>>, vector<1x32xf32>
    %117 = vector.shape_cast %116 : vector<1x32xf32> to vector<32xf32>
    %118 = vector.shape_cast %117 : vector<32xf32> to vector<1x32xf32>
    %119 = vector.broadcast %118 : vector<1x32xf32> to vector<8x32xf32>
    %120 = arith.addf %115, %119 : vector<8x32xf32>
    %c0_41 = arith.constant 0 : index
    %c0_42 = arith.constant 0 : index
    %c0_43 = arith.constant 0 : index
    %121 = vector.load %arg2[%c0_41, %c0_42, %c0_43] : memref<1x8x32xf32, #tpu.memory_space<vmem>>, vector<1x8x32xf32>
    %122 = vector.shape_cast %121 : vector<1x8x32xf32> to vector<8x32xf32>
    %123 = arith.truncf %122 : vector<8x32xf32> to vector<8x32xbf16>
    %c0_44 = arith.constant 0 : index
    %c0_45 = arith.constant 0 : index
    %124 = vector.load %arg12[%c0_44, %c0_45] : memref<32x64xbf16, #tpu.memory_space<vmem>>, vector<32x64xbf16>
    %cst_46 = arith.constant dense<0.000000e+00> : vector<8x64xf32>
    %125 = tpu.matmul %123, %124, %cst_46 {dimension_numbers = #tpu.dot_dimension_numbers<[1], [0], [0], [1], [0, 0, 1, 1], [], []>} : vector<8x32xbf16>, vector<32x64xbf16>, vector<8x64xf32> -> vector<8x64xf32>
    %c0_47 = arith.constant 0 : index
    %c0_48 = arith.constant 0 : index
    %126 = vector.load %arg13[%c0_47, %c0_48] : memref<1x64xf32, #tpu.memory_space<vmem>>, vector<1x64xf32>
    %127 = vector.shape_cast %126 : vector<1x64xf32> to vector<64xf32>
    %128 = vector.shape_cast %127 : vector<64xf32> to vector<1x64xf32>
    %129 = vector.broadcast %128 : vector<1x64xf32> to vector<8x64xf32>
    %130 = arith.addf %125, %129 : vector<8x64xf32>
    %c0_49 = arith.constant 0 : index
    %c0_50 = arith.constant 0 : index
    %c0_51 = arith.constant 0 : index
    %131 = vector.load %arg4[%c0_49, %c0_50, %c0_51] : memref<1x8x8xf32, #tpu.memory_space<vmem>>, vector<1x8x8xf32>
    %132 = vector.shape_cast %131 : vector<1x8x8xf32> to vector<8x8xf32>
    %cst_52 = arith.constant 1.000000e+00 : f32
    %133 = vector.broadcast %cst_52 : f32 to vector<8x8xf32>
    %134 = arith.subf %132, %133 : vector<8x8xf32>
    %cst_53 = arith.constant 1.000000e+09 : f32
    %135 = vector.broadcast %cst_53 : f32 to vector<8x8xf32>
    %136 = arith.mulf %134, %135 : vector<8x8xf32>
    %137 = vector.extract_strided_slice %130 {offsets = [0, 0], sizes = [8, 32], strides = [1, 1]} : vector<8x64xf32> to vector<8x32xf32>
    %138 = vector.extract_strided_slice %130 {offsets = [0, 32], sizes = [8, 32], strides = [1, 1]} : vector<8x64xf32> to vector<8x32xf32>
    %139 = vector.shape_cast %120 : vector<8x32xf32> to vector<8x4x8xf32>
    %140 = tpu.transpose %139, [1, 0, 2] : vector<8x4x8xf32> -> vector<4x8x8xf32>
    %141 = arith.truncf %140 : vector<4x8x8xf32> to vector<4x8x8xbf16>
    %142 = vector.shape_cast %137 : vector<8x32xf32> to vector<8x4x8xf32>
    %143 = tpu.transpose %142, [1, 0, 2] : vector<8x4x8xf32> -> vector<4x8x8xf32>
    %144 = arith.truncf %143 : vector<4x8x8xf32> to vector<4x8x8xbf16>
    %145 = vector.shape_cast %138 : vector<8x32xf32> to vector<8x4x8xf32>
    %146 = tpu.transpose %145, [1, 0, 2] : vector<8x4x8xf32> -> vector<4x8x8xf32>
    %147 = arith.truncf %146 : vector<4x8x8xf32> to vector<4x8x8xbf16>
    "tpu.trace_start"() <{level = 10 : i32, message = "hqd,hkd->hqk"}> : () -> ()
    %cst_54 = arith.constant dense<0.000000e+00> : vector<4x8x8xf32>
    %148 = tpu.matmul %141, %144, %cst_54 {dimension_numbers = #tpu.dot_dimension_numbers<[2], [2], [1], [1], [0, 0, 0, 1, 1, 1], [0], [0]>} : vector<4x8x8xbf16>, vector<4x8x8xbf16>, vector<4x8x8xf32> -> vector<4x8x8xf32>
    "tpu.trace_stop"() : () -> ()
    %cst_55 = arith.constant 0.353553385 : f32
    %149 = vector.broadcast %cst_55 : f32 to vector<4x8x8xf32>
    %150 = arith.mulf %148, %149 : vector<4x8x8xf32>
    %151 = vector.shape_cast %136 : vector<8x8xf32> to vector<1x8x8xf32>
    %152 = vector.broadcast %151 : vector<1x8x8xf32> to vector<4x8x8xf32>
    %153 = arith.addf %150, %152 : vector<4x8x8xf32>
    %cst_56 = arith.constant dense<0xFF800000> : vector<4x8xf32>
    %154 = vector.multi_reduction <maximumf>, %153, %cst_56 [2] : vector<4x8x8xf32> to vector<4x8xf32>
    %155 = vector.shape_cast %154 : vector<4x8xf32> to vector<4x8x1xf32>
    %156 = vector.broadcast %155 : vector<4x8x1xf32> to vector<4x8x8xf32>
    %157 = arith.subf %153, %156 : vector<4x8x8xf32>
    %158 = math.exp %157 : vector<4x8x8xf32>
    %cst_57 = arith.constant dense<0.000000e+00> : vector<4x8xf32>
    %159 = vector.multi_reduction <add>, %158, %cst_57 [2] : vector<4x8x8xf32> to vector<4x8xf32>
    %160 = vector.shape_cast %159 : vector<4x8xf32> to vector<4x8x1xf32>
    %161 = tpu.reciprocal %160 {approx = true} : vector<4x8x1xf32> -> vector<4x8x1xf32>
    %162 = vector.broadcast %161 : vector<4x8x1xf32> to vector<4x8x8xf32>
    %163 = arith.mulf %158, %162 : vector<4x8x8xf32>
    %164 = arith.truncf %163 : vector<4x8x8xf32> to vector<4x8x8xbf16>
    "tpu.trace_start"() <{level = 10 : i32, message = "hqk,hkd->hqd"}> : () -> ()
    %cst_58 = arith.constant dense<0.000000e+00> : vector<4x8x8xf32>
    %165 = tpu.matmul %164, %147, %cst_58 {dimension_numbers = #tpu.dot_dimension_numbers<[2], [1], [1], [2], [0, 0, 0, 1, 1, 2], [0], [0]>} : vector<4x8x8xbf16>, vector<4x8x8xbf16>, vector<4x8x8xf32> -> vector<4x8x8xf32>
    "tpu.trace_stop"() : () -> ()
    %166 = tpu.transpose %165, [1, 0, 2] : vector<4x8x8xf32> -> vector<8x4x8xf32>
    %167 = vector.shape_cast %166 : vector<8x4x8xf32> to vector<8x32xf32>
    %168 = arith.truncf %167 : vector<8x32xf32> to vector<8x32xbf16>
    %c0_59 = arith.constant 0 : index
    %c0_60 = arith.constant 0 : index
    %169 = vector.load %arg14[%c0_59, %c0_60] : memref<32x32xbf16, #tpu.memory_space<vmem>>, vector<32x32xbf16>
    %cst_61 = arith.constant dense<0.000000e+00> : vector<8x32xf32>
    %170 = tpu.matmul %168, %169, %cst_61 {dimension_numbers = #tpu.dot_dimension_numbers<[1], [0], [0], [1], [0, 0, 1, 1], [], []>} : vector<8x32xbf16>, vector<32x32xbf16>, vector<8x32xf32> -> vector<8x32xf32>
    %c0_62 = arith.constant 0 : index
    %c0_63 = arith.constant 0 : index
    %171 = vector.load %arg15[%c0_62, %c0_63] : memref<1x32xf32, #tpu.memory_space<vmem>>, vector<1x32xf32>
    %172 = vector.shape_cast %171 : vector<1x32xf32> to vector<32xf32>
    %173 = vector.shape_cast %172 : vector<32xf32> to vector<1x32xf32>
    %174 = vector.broadcast %173 : vector<1x32xf32> to vector<8x32xf32>
    %175 = arith.addf %170, %174 : vector<8x32xf32>
    %176 = arith.addf %84, %175 : vector<8x32xf32>
    %c4 = arith.constant 4 : index
    %c0_64 = arith.constant 0 : index
    %177 = vector.load %arg5[%c4, %c0_64] : memref<6x32xf32, #tpu.memory_space<vmem>>, vector<1x32xf32>
    %178 = vector.shape_cast %177 : vector<1x32xf32> to vector<32xf32>
    %c5 = arith.constant 5 : index
    %c0_65 = arith.constant 0 : index
    %179 = vector.load %arg5[%c5, %c0_65] : memref<6x32xf32, #tpu.memory_space<vmem>>, vector<1x32xf32>
    %180 = vector.shape_cast %179 : vector<1x32xf32> to vector<32xf32>
    %cst_66 = arith.constant dense<0.000000e+00> : vector<8xf32>
    %181 = vector.multi_reduction <add>, %176, %cst_66 [1] : vector<8x32xf32> to vector<8xf32>
    %182 = vector.shape_cast %181 : vector<8xf32> to vector<8x1xf32>
    %cst_67 = arith.constant 3.200000e+01 : f32
    %183 = vector.broadcast %cst_67 : f32 to vector<8x1xf32>
    %184 = arith.divf %182, %183 : vector<8x1xf32>
    %185 = arith.mulf %176, %176 : vector<8x32xf32>
    %cst_68 = arith.constant dense<0.000000e+00> : vector<8xf32>
    %186 = vector.multi_reduction <add>, %185, %cst_68 [1] : vector<8x32xf32> to vector<8xf32>
    %187 = vector.shape_cast %186 : vector<8xf32> to vector<8x1xf32>
    %cst_69 = arith.constant 3.200000e+01 : f32
    %188 = vector.broadcast %cst_69 : f32 to vector<8x1xf32>
    %189 = arith.divf %187, %188 : vector<8x1xf32>
    %190 = arith.mulf %184, %184 : vector<8x1xf32>
    %191 = arith.subf %189, %190 : vector<8x1xf32>
    %192 = vector.broadcast %184 : vector<8x1xf32> to vector<8x32xf32>
    %193 = arith.subf %176, %192 : vector<8x32xf32>
    %cst_70 = arith.constant 9.99999974E-6 : f32
    %194 = vector.broadcast %cst_70 : f32 to vector<8x1xf32>
    %195 = arith.addf %191, %194 : vector<8x1xf32>
    %196 = math.rsqrt %195 : vector<8x1xf32>
    %197 = vector.broadcast %196 : vector<8x1xf32> to vector<8x32xf32>
    %198 = arith.mulf %193, %197 : vector<8x32xf32>
    %199 = vector.shape_cast %178 : vector<32xf32> to vector<1x32xf32>
    %200 = vector.broadcast %199 : vector<1x32xf32> to vector<8x32xf32>
    %201 = arith.mulf %198, %200 : vector<8x32xf32>
    %202 = vector.shape_cast %180 : vector<32xf32> to vector<1x32xf32>
    %203 = vector.broadcast %202 : vector<1x32xf32> to vector<8x32xf32>
    %204 = arith.addf %201, %203 : vector<8x32xf32>
    %205 = arith.truncf %204 : vector<8x32xf32> to vector<8x32xbf16>
    %c0_71 = arith.constant 0 : index
    %c0_72 = arith.constant 0 : index
    %206 = vector.load %arg16[%c0_71, %c0_72] : memref<32x64xbf16, #tpu.memory_space<vmem>>, vector<32x64xbf16>
    %cst_73 = arith.constant dense<0.000000e+00> : vector<8x64xf32>
    %207 = tpu.matmul %205, %206, %cst_73 {dimension_numbers = #tpu.dot_dimension_numbers<[1], [0], [0], [1], [0, 0, 1, 1], [], []>} : vector<8x32xbf16>, vector<32x64xbf16>, vector<8x64xf32> -> vector<8x64xf32>
    %c0_74 = arith.constant 0 : index
    %c0_75 = arith.constant 0 : index
    %208 = vector.load %arg17[%c0_74, %c0_75] : memref<1x64xf32, #tpu.memory_space<vmem>>, vector<1x64xf32>
    %209 = vector.shape_cast %208 : vector<1x64xf32> to vector<64xf32>
    %210 = vector.shape_cast %209 : vector<64xf32> to vector<1x64xf32>
    %211 = vector.broadcast %210 : vector<1x64xf32> to vector<8x64xf32>
    %212 = arith.addf %207, %211 : vector<8x64xf32>
    %cst_76 = arith.constant 0.000000e+00 : f32
    %213 = vector.broadcast %cst_76 : f32 to vector<8x64xf32>
    %214 = arith.maximumf %212, %213 : vector<8x64xf32>
    %215 = arith.truncf %214 : vector<8x64xf32> to vector<8x64xbf16>
    %c0_77 = arith.constant 0 : index
    %c0_78 = arith.constant 0 : index
    %216 = vector.load %arg18[%c0_77, %c0_78] : memref<64x32xbf16, #tpu.memory_space<vmem>>, vector<64x32xbf16>
    %cst_79 = arith.constant dense<0.000000e+00> : vector<8x32xf32>
    %217 = tpu.matmul %215, %216, %cst_79 {dimension_numbers = #tpu.dot_dimension_numbers<[1], [0], [0], [1], [0, 0, 1, 1], [], []>} : vector<8x64xbf16>, vector<64x32xbf16>, vector<8x32xf32> -> vector<8x32xf32>
    %c0_80 = arith.constant 0 : index
    %c0_81 = arith.constant 0 : index
    %218 = vector.load %arg19[%c0_80, %c0_81] : memref<1x32xf32, #tpu.memory_space<vmem>>, vector<1x32xf32>
    %219 = vector.shape_cast %218 : vector<1x32xf32> to vector<32xf32>
    %220 = vector.shape_cast %219 : vector<32xf32> to vector<1x32xf32>
    %221 = vector.broadcast %220 : vector<1x32xf32> to vector<8x32xf32>
    %222 = arith.addf %217, %221 : vector<8x32xf32>
    %223 = arith.addf %176, %222 : vector<8x32xf32>
    %c0_82 = arith.constant 0 : index
    %c0_83 = arith.constant 0 : index
    %c0_84 = arith.constant 0 : index
    %224 = vector.load %arg20[%c0_82, %c0_83, %c0_84] : memref<1x8x32xf32, #tpu.memory_space<vmem>>, vector<1x8x32xf32>
    %225 = vector.shape_cast %224 : vector<1x8x32xf32> to vector<8x32xf32>
    %226 = vector.shape_cast %223 : vector<8x32xf32> to vector<1x8x32xf32>
    tpu.vector_store %arg20[%c0_82, %c0_83, %c0_84], %226 {strides = array<i32>} : memref<1x8x32xf32, #tpu.memory_space<vmem>>, vector<1x8x32xf32>,
    return
  }
  func.func @transform_0(%arg0: i32) -> (i32, i32, i32) {
    %c0_i32 = arith.constant 0 : i32
    %c0_i32_0 = arith.constant 0 : i32
    %c0_i32_1 = arith.constant 0 : i32
    return %arg0, %c0_i32, %c0_i32_0 : i32, i32, i32
  }
  func.func @transform_1(%arg0: i32) -> (i32, i32, i32) {
    %c0_i32 = arith.constant 0 : i32
    %c0_i32_0 = arith.constant 0 : i32
    %c0_i32_1 = arith.constant 0 : i32
    return %arg0, %c0_i32, %c0_i32_0 : i32, i32, i32
  }
  func.func @transform_2(%arg0: i32) -> (i32, i32, i32) {
    %c0_i32 = arith.constant 0 : i32
    %c0_i32_0 = arith.constant 0 : i32
    %c0_i32_1 = arith.constant 0 : i32
    return %arg0, %c0_i32, %c0_i32_0 : i32, i32, i32
  }
  func.func @transform_3(%arg0: i32) -> (i32, i32, i32) {
    %c0_i32 = arith.constant 0 : i32
    %c0_i32_0 = arith.constant 0 : i32
    %c0_i32_1 = arith.constant 0 : i32
    return %arg0, %c0_i32, %c0_i32_0 : i32, i32, i32
  }
  func.func @transform_4(%arg0: i32) -> (i32, i32) {
    %c0_i32 = arith.constant 0 : i32
    %c0_i32_0 = arith.constant 0 : i32
    %c0_i32_1 = arith.constant 0 : i32
    return %c0_i32, %c0_i32_0 : i32, i32
  }
  func.func @transform_5(%arg0: i32) -> (i32, i32) {
    %c0_i32 = arith.constant 0 : i32
    %c0_i32_0 = arith.constant 0 : i32
    %c0_i32_1 = arith.constant 0 : i32
    return %c0_i32, %c0_i32_0 : i32, i32
  }
  func.func @transform_6(%arg0: i32) -> (i32, i32) {
    %c0_i32 = arith.constant 0 : i32
    %c0_i32_0 = arith.constant 0 : i32
    %c0_i32_1 = arith.constant 0 : i32
    return %c0_i32, %c0_i32_0 : i32, i32
  }
  func.func @transform_7(%arg0: i32) -> (i32, i32) {
    %c0_i32 = arith.constant 0 : i32
    %c0_i32_0 = arith.constant 0 : i32
    %c0_i32_1 = arith.constant 0 : i32
    return %c0_i32, %c0_i32_0 : i32, i32
  }
  func.func @transform_8(%arg0: i32) -> (i32, i32) {
    %c0_i32 = arith.constant 0 : i32
    %c0_i32_0 = arith.constant 0 : i32
    %c0_i32_1 = arith.constant 0 : i32
    return %c0_i32, %c0_i32_0 : i32, i32
  }
  func.func @transform_9(%arg0: i32) -> (i32, i32) {
    %c0_i32 = arith.constant 0 : i32
    %c0_i32_0 = arith.constant 0 : i32
    %c0_i32_1 = arith.constant 0 : i32
    return %c0_i32, %c0_i32_0 : i32, i32
  }
  func.func @transform_10(%arg0: i32) -> (i32, i32) {
    %c0_i32 = arith.constant 0 : i32
    %c0_i32_0 = arith.constant 0 : i32
    %c0_i32_1 = arith.constant 0 : i32
    return %c0_i32, %c0_i32_0 : i32, i32
  }
  func.func @transform_11(%arg0: i32) -> (i32, i32) {
    %c0_i32 = arith.constant 0 : i32
    %c0_i32_0 = arith.constant 0 : i32
    %c0_i32_1 = arith.constant 0 : i32
    return %c0_i32, %c0_i32_0 : i32, i32
  }
  func.func @transform_12(%arg0: i32) -> (i32, i32) {
    %c0_i32 = arith.constant 0 : i32
    %c0_i32_0 = arith.constant 0 : i32
    %c0_i32_1 = arith.constant 0 : i32
    return %c0_i32, %c0_i32_0 : i32, i32
  }
  func.func @transform_13(%arg0: i32) -> (i32, i32) {
    %c0_i32 = arith.constant 0 : i32
    %c0_i32_0 = arith.constant 0 : i32
    %c0_i32_1 = arith.constant 0 : i32
    return %c0_i32, %c0_i32_0 : i32, i32
  }
  func.func @transform_14(%arg0: i32) -> (i32, i32) {
    %c0_i32 = arith.constant 0 : i32
    %c0_i32_0 = arith.constant 0 : i32
    %c0_i32_1 = arith.constant 0 : i32
    return %c0_i32, %c0_i32_0 : i32, i32
  }
  func.func @transform_15(%arg0: i32) -> (i32, i32) {
    %c0_i32 = arith.constant 0 : i32
    %c0_i32_0 = arith.constant 0 : i32
    %c0_i32_1 = arith.constant 0 : i32
    return %c0_i32, %c0_i32_0 : i32, i32
  }
  func.func @transform_16(%arg0: i32) -> (i32, i32) {
    %c0_i32 = arith.constant 0 : i32
    %c0_i32_0 = arith.constant 0 : i32
    %c0_i32_1 = arith.constant 0 : i32
    return %c0_i32, %c0_i32_0 : i32, i32
  }
  func.func @transform_17(%arg0: i32) -> (i32, i32) {
    %c0_i32 = arith.constant 0 : i32
    %c0_i32_0 = arith.constant 0 : i32
    %c0_i32_1 = arith.constant 0 : i32
    return %c0_i32, %c0_i32_0 : i32, i32
  }
  func.func @transform_18(%arg0: i32) -> (i32, i32) {
    %c0_i32 = arith.constant 0 : i32
    %c0_i32_0 = arith.constant 0 : i32
    %c0_i32_1 = arith.constant 0 : i32
    return %c0_i32, %c0_i32_0 : i32, i32
  }
  func.func @transform_19(%arg0: i32) -> (i32, i32, i32) {
    %c0_i32 = arith.constant 0 : i32
    %c0_i32_0 = arith.constant 0 : i32
    %c0_i32_1 = arith.constant 0 : i32
    return %arg0, %c0_i32, %c0_i32_0 : i32, i32, i32
  }
}

</mosaic_0001>

<llo_original>
// kernel: tpu_custom_call.1
$region0: #{tpu_custom_call.1}
  #allocation0 [shape = 'u32[]', space=smem, size = 0x4, offset = 0x4, fixed_abs, tag = 'smem constant byte address 0x4 - core index']
  #allocation1 [shape = 'u32[72,128]{1,0:T(1,128)}', space=vmem, size = 0x9000, scoped, tag = 'internal scratch']
  %s0 = inlined_call_operand.vmem [shape: f32[2,8,32], index: 0, kind: input, shape index: {}]
  %s1 = inlined_call_operand.vmem [shape: f32[2,8,32], index: 1, kind: input, shape index: {}]
  %s2 = inlined_call_operand.vmem [shape: f32[2,8,8], index: 2, kind: input, shape index: {}]
  %s3 = inlined_call_operand.hbm [shape: f32[2,8,8], index: 3, kind: input, shape index: {}]
  %s4 = inlined_call_operand.hbm [shape: f32[6,32], index: 4, kind: input, shape index: {}]
  %s5 = inlined_call_operand.hbm [shape: bf16[32,96], index: 5, kind: input, shape index: {}]
  %s6 = inlined_call_operand.hbm [shape: f32[1,96], index: 6, kind: input, shape index: {}]
  %s7 = inlined_call_operand.hbm [shape: bf16[32,32], index: 7, kind: input, shape index: {}]
  %s8 = inlined_call_operand.hbm [shape: f32[1,32], index: 8, kind: input, shape index: {}]
  %s9 = inlined_call_operand.hbm [shape: bf16[32,32], index: 9, kind: input, shape index: {}]
  %s10 = inlined_call_operand.hbm [shape: f32[1,32], index: 10, kind: input, shape index: {}]
  %s11 = inlined_call_operand.hbm [shape: bf16[32,64], index: 11, kind: input, shape index: {}]
  %s12 = inlined_call_operand.hbm [shape: f32[1,64], index: 12, kind: input, shape index: {}]
  %s13 = inlined_call_operand.hbm [shape: bf16[32,32], index: 13, kind: input, shape index: {}]
  %s14 = inlined_call_operand.hbm [shape: f32[1,32], index: 14, kind: input, shape index: {}]
  %s15 = inlined_call_operand.hbm [shape: bf16[32,64], index: 15, kind: input, shape index: {}]
  %s16 = inlined_call_operand.hbm [shape: f32[1,64], index: 16, kind: input, shape index: {}]
  %s17 = inlined_call_operand.vmem [shape: bf16[64,32], index: 17, kind: input, shape index: {}]
  %s18 = inlined_call_operand.vmem [shape: f32[1,32], index: 18, kind: input, shape index: {}]
  %s19 = inlined_call_operand.hbm [shape: f32[2,8,32], index: 19, kind: output, shape index: {}]
  %s20 = sld [smem:[#allocation0]]
  $region165: #{tpu_custom_call.1} parent=0
    _
  %s22 = ssub.s32 1, %s20
  %s23 = scalar_select 0, %s22, %s20
  $region1: #{tpu_custom_call.1} parent=0
    #allocation2 [shape = 'u8[8192]{0}', space=vmem, size = 0x2000, scoped, tag = 'input window, operand 3']
    #allocation3 [shape = 's32[2]{0}', space=sflag, size = 0x8, scoped, tag = 'scoped memory for tpu_custom_call.1']
    #allocation4 [shape = 's32[2]{0}', space=sflag, size = 0x8, scoped, tag = 'scoped memory for tpu_custom_call.1']
    #allocation5 [shape = 'u8[4096]{0}', space=vmem, size = 0x1000, scoped, tag = 'input window, operand 4, single buffered']
    #allocation6 [shape = 's32[1]{0}', space=sflag, size = 0x4, scoped, tag = 'scoped memory for tpu_custom_call.1']
    #allocation7 [shape = 'u8[8192]{0}', space=vmem, size = 0x2000, scoped, tag = 'input window, operand 5, single buffered']
    #allocation8 [shape = 'u8[512]{0}', space=vmem, size = 0x400, scoped, tag = 'input window, operand 6, single buffered']
    #allocation9 [shape = 's32[1]{0}', space=sflag, size = 0x4, scoped, tag = 'scoped memory for tpu_custom_call.1']
    #allocation10 [shape = 'u8[8192]{0}', space=vmem, size = 0x2000, scoped, tag = 'input window, operand 7, single buffered']
    #allocation11 [shape = 'u8[512]{0}', space=vmem, size = 0x400, scoped, tag = 'input window, operand 8, single buffered']
    #allocation12 [shape = 's32[1]{0}', space=sflag, size = 0x4, scoped, tag = 'scoped memory for tpu_custom_call.1']
    #allocation13 [shape = 'u8[8192]{0}', space=vmem, size = 0x2000, scoped, tag = 'input window, operand 9, single buffered']
    #allocation14 [shape = 'u8[512]{0}', space=vmem, size = 0x400, scoped, tag = 'input window, operand 10, single buffered']
    #allocation15 [shape = 's32[1]{0}', space=sflag, size = 0x4, scoped, tag = 'scoped memory for tpu_custom_call.1']
    #allocation16 [shape = 'u8[8192]{0}', space=vmem, size = 0x2000, scoped, tag = 'input window, operand 11, single buffered']
    #allocation17 [shape = 'u8[512]{0}', space=vmem, size = 0x400, scoped, tag = 'input window, operand 12, single buffered']
    #allocation18 [shape = 's32[1]{0}', space=sflag, size = 0x4, scoped, tag = 'scoped memory for tpu_custom_call.1']
    #allocation19 [shape = 'u8[8192]{0}', space=vmem, size = 0x2000, scoped, tag = 'input window, operand 13, single buffered']
    #allocation20 [shape = 'u8[512]{0}', space=vmem, size = 0x400, scoped, tag = 'input window, operand 14, single buffered']
    #allocation21 [shape = 's32[1]{0}', space=sflag, size = 0x4, scoped, tag = 'scoped memory for tpu_custom_call.1']
    #allocation22 [shape = 'u8[8192]{0}', space=vmem, size = 0x2000, scoped, tag = 'input window, operand 15, single buffered']
    #allocation23 [shape = 'u8[512]{0}', space=vmem, size = 0x400, scoped, tag = 'input window, operand 16, single buffered']
    #allocation24 [shape = 's32[1]{0}', space=sflag, size = 0x4, scoped, tag = 'scoped memory for tpu_custom_call.1']
    #allocation25 [shape = 'u8[8192]{0}', space=vmem, size = 0x2000, scoped, tag = 'output window, operand 0']
    %24 = vsyncpa [#allocation3], 0
    %s25 = scalar_lea.sflag [#allocation3], 1
    %26 = vsyncpa %s25, 0
    %27 = vsyncpa [#allocation6], 0
    %28 = vsyncpa [#allocation9], 0
    %29 = vsyncpa [#allocation12], 0
    %30 = vsyncpa [#allocation15], 0
    %31 = vsyncpa [#allocation18], 0
    %32 = vsyncpa [#allocation21], 0
    %33 = vsyncpa [#allocation24], 0
    %34 = vsyncpa [#allocation4], 0
    %s35 = scalar_lea.sflag [#allocation4], 1
    %36 = vsyncpa %s35, 0
    loop: start=0, step=1, limit=4
    $region2: #{tpu_custom_call.1} parent=1 // loop_pre_header
      _
    $region3: #{tpu_custom_call.1} parent=1 // loop_header
      %s38 = sphi 0, %s42
      %p39 = scmp.ge.s32.totalorder %s38, 4
      %s48 = sphi 0, %s50
      %s51 = sphi 0, %s48
      %s52 = sphi 0, %s51
      %s68 = sphi 0, %s52
      %s74 = sphi 0, %s76
      %s77 = sphi 0, %s74
      %s78 = sphi 0, %s77
      %s94 = sphi 0, %s78
      %s100 = sphi 0, %s102
      %s103 = sphi 0, %s100
      %s104 = sphi 0, %s103
      %s120 = sphi 0, %s104
      %s126 = sphi 0, %s128
      %s129 = sphi 0, %s126
      %s130 = sphi 0, %s129
      %s146 = sphi 0, %s130
      %s150 = sphi 0, %s150
      %s152 = sphi 0, %s150
      %s153 = sphi 0, %s152
      %s167 = sphi 0, %s153
      %s171 = sphi 0, %s171
      %s173 = sphi 0, %s171
      %s174 = sphi 0, %s173
      %s188 = sphi 0, %s174
      %s192 = sphi 0, %s192
      %s194 = sphi 0, %s192
      %s195 = sphi 0, %s194
      %s209 = sphi 0, %s195
      %s213 = sphi 0, %s213
      %s215 = sphi 0, %s213
      %s216 = sphi 0, %s215
      %s230 = sphi 0, %s216
      %s234 = sphi 0, %s234
      %s236 = sphi 0, %s234
      %s237 = sphi 0, %s236
      %s251 = sphi 0, %s237
      %s255 = sphi 0, %s255
      %s257 = sphi 0, %s255
      %s258 = sphi 0, %s257
      %s272 = sphi 0, %s258
      %s276 = sphi 0, %s276
      %s278 = sphi 0, %s276
      %s279 = sphi 0, %s278
      %s293 = sphi 0, %s279
      %s297 = sphi 0, %s297
      %s299 = sphi 0, %s297
      %s300 = sphi 0, %s299
      %s314 = sphi 0, %s300
      %s318 = sphi 0, %s318
      %s320 = sphi 0, %s318
      %s321 = sphi 0, %s320
      %s335 = sphi 0, %s321
      %s339 = sphi 0, %s339
      %s341 = sphi 0, %s339
      %s342 = sphi 0, %s341
      %s356 = sphi 0, %s342
      %s360 = sphi 0, %s360
      %s362 = sphi 0, %s360
      %s363 = sphi 0, %s362
      %s377 = sphi 0, %s363
      %s381 = sphi 0, %s381
      %s383 = sphi 0, %s381
      %s384 = sphi 0, %s383
      %s398 = sphi 0, %s384
      %s402 = sphi 0, %s402
      %s404 = sphi 0, %s402
      %s405 = sphi 0, %s404
      %s419 = sphi 0, %s405
      %s423 = sphi 0, %s423
      %s425 = sphi 0, %s423
      %s426 = sphi 0, %s425
      %s440 = sphi 0, %s426
      %s444 = sphi 0, %s444
      %s446 = sphi 0, %s444
      %s447 = sphi 0, %s446
      %s461 = sphi 0, %s447
      %s467 = sphi 0, %s469
      %s470 = sphi 0, %s467
      %s471 = sphi 0, %s470
      %s487 = sphi 0, %s471
    $region4: #{tpu_custom_call.1} parent=1 // loop_header_branch
      %41 = sbr.rel (%p39) target = $region8
    $region5: #{tpu_custom_call.1} parent=1 // loop_body
      %s43 = ssub.s32 %s38, 1
      %s44 = ssub.s32 %s38, 2
      %s45 = sadd.s32 %s38, 1
      %s46 = ssub.s32 %s38, %s45
      %p47 = scmp.eq.s32.totalorder %s46, 0
      %s49 = sadd.s32 %s48, 1
      %s50 = scalar_select %p47, %s48, %s49
      %p53 = pneg %p47
      %p54 = scmp.eq.s32.totalorder %s38, 1
      %p55 = por %p53, %p54
      %p56 = scmp.ne.s32.totalorder %s48, %s51
      %p57 = scmp.eq.s32.totalorder %s38, 0
      %p58 = por %p56, %p57
      %p59 = scmp.ne.s32.totalorder %s48, %s51
      %p60 = scmp.eq.s32.totalorder %s43, 1
      %p61 = por %p59, %p60
      %p62 = scmp.ne.s32.totalorder %s51, %s52
      %p63 = scmp.eq.s32.totalorder %s43, 0
      %p64 = por %p62, %p63
      %p65 = scmp.ne.s32.totalorder %s51, %s52
      %p66 = scmp.eq.s32.totalorder %s44, 1
      %p67 = por %p65, %p66
      %p69 = scmp.ne.s32.totalorder %s52, %s68
      %p70 = scmp.eq.s32.totalorder %s44, 0
      %p71 = por %p69, %p70
      %s72 = ssub.s32 %s38, %s45
      %p73 = scmp.eq.s32.totalorder %s72, 0
      %s75 = sadd.s32 %s74, 1
      %s76 = scalar_select %p73, %s74, %s75
      %p79 = pneg %p73
      %p80 = scmp.eq.s32.totalorder %s38, 1
      %p81 = por %p79, %p80
      %p82 = scmp.ne.s32.totalorder %s74, %s77
      %p83 = scmp.eq.s32.totalorder %s38, 0
      %p84 = por %p82, %p83
      %p85 = scmp.ne.s32.totalorder %s74, %s77
      %p86 = scmp.eq.s32.totalorder %s43, 1
      %p87 = por %p85, %p86
      %p88 = scmp.ne.s32.totalorder %s77, %s78
      %p89 = scmp.eq.s32.totalorder %s43, 0
      %p90 = por %p88, %p89
      %p91 = scmp.ne.s32.totalorder %s77, %s78
      %p92 = scmp.eq.s32.totalorder %s44, 1
      %p93 = por %p91, %p92
      %p95 = scmp.ne.s32.totalorder %s78, %s94
      %p96 = scmp.eq.s32.totalorder %s44, 0
      %p97 = por %p95, %p96
      %s98 = ssub.s32 %s38, %s45
      %p99 = scmp.eq.s32.totalorder %s98, 0
      %s101 = sadd.s32 %s100, 1
      %s102 = scalar_select %p99, %s100, %s101
      %p105 = pneg %p99
      %p106 = scmp.eq.s32.totalorder %s38, 1
      %p107 = por %p105, %p106
      %p108 = scmp.ne.s32.totalorder %s100, %s103
      %p109 = scmp.eq.s32.totalorder %s38, 0
      %p110 = por %p108, %p109
      %p111 = scmp.ne.s32.totalorder %s100, %s103
      %p112 = scmp.eq.s32.totalorder %s43, 1
      %p113 = por %p111, %p112
      %p114 = scmp.ne.s32.totalorder %s103, %s104
      %p115 = scmp.eq.s32.totalorder %s43, 0
      %p116 = por %p114, %p115
      %p117 = scmp.ne.s32.totalorder %s103, %s104
      %p118 = scmp.eq.s32.totalorder %s44, 1
      %p119 = por %p117, %p118
      %p121 = scmp.ne.s32.totalorder %s104, %s120
      %p122 = scmp.eq.s32.totalorder %s44, 0
      %p123 = por %p121, %p122
      %s124 = ssub.s32 %s38, %s45
      %p125 = scmp.eq.s32.totalorder %s124, 0
      %s127 = sadd.s32 %s126, 1
      %s128 = scalar_select %p125, %s126, %s127
      %p131 = pneg %p125
      %p132 = scmp.eq.s32.totalorder %s38, 1
      %p133 = por %p131, %p132
      %p134 = scmp.ne.s32.totalorder %s126, %s129
      %p135 = scmp.eq.s32.totalorder %s38, 0
      %p136 = por %p134, %p135
      %p137 = scmp.ne.s32.totalorder %s126, %s129
      %p138 = scmp.eq.s32.totalorder %s43, 1
      %p139 = por %p137, %p138
      %p140 = scmp.ne.s32.totalorder %s129, %s130
      %p141 = scmp.eq.s32.totalorder %s43, 0
      %p142 = por %p140, %p141
      %p143 = scmp.ne.s32.totalorder %s129, %s130
      %p144 = scmp.eq.s32.totalorder %s44, 1
      %p145 = por %p143, %p144
      %p147 = scmp.ne.s32.totalorder %s130, %s146
      %p148 = scmp.eq.s32.totalorder %s44, 0
      %p149 = por %p147, %p148
      %s151 = sadd.s32 %s150, 1
      %p154 = scmp.eq.s32.totalorder %s38, 1
      %p155 = scmp.ne.s32.totalorder %s150, %s152
      %p156 = scmp.eq.s32.totalorder %s38, 0
      %p157 = por %p155, %p156
      %p158 = scmp.ne.s32.totalorder %s150, %s152
      %p159 = scmp.eq.s32.totalorder %s43, 1
      %p160 = por %p158, %p159
      %p161 = scmp.ne.s32.totalorder %s152, %s153
      %p162 = scmp.eq.s32.totalorder %s43, 0
      %p163 = por %p161, %p162
      %p164 = scmp.ne.s32.totalorder %s152, %s153
      %p165 = scmp.eq.s32.totalorder %s44, 1
      %p166 = por %p164, %p165
      %p168 = scmp.ne.s32.totalorder %s153, %s167
      %p169 = scmp.eq.s32.totalorder %s44, 0
      %p170 = por %p168, %p169
      %s172 = sadd.s32 %s171, 1
      %p175 = scmp.eq.s32.totalorder %s38, 1
      %p176 = scmp.ne.s32.totalorder %s171, %s173
      %p177 = scmp.eq.s32.totalorder %s38, 0
      %p178 = por %p176, %p177
      %p179 = scmp.ne.s32.totalorder %s171, %s173
      %p180 = scmp.eq.s32.totalorder %s43, 1
      %p181 = por %p179, %p180
      %p182 = scmp.ne.s32.totalorder %s173, %s174
      %p183 = scmp.eq.s32.totalorder %s43, 0
      %p184 = por %p182, %p183
      %p185 = scmp.ne.s32.totalorder %s173, %s174
      %p186 = scmp.eq.s32.totalorder %s44, 1
      %p187 = por %p185, %p186
      %p189 = scmp.ne.s32.totalorder %s174, %s188
      %p190 = scmp.eq.s32.totalorder %s44, 0
      %p191 = por %p189, %p190
      %s193 = sadd.s32 %s192, 1
      %p196 = scmp.eq.s32.totalorder %s38, 1
      %p197 = scmp.ne.s32.totalorder %s192, %s194
      %p198 = scmp.eq.s32.totalorder %s38, 0
      %p199 = por %p197, %p198
      %p200 = scmp.ne.s32.totalorder %s192, %s194
      %p201 = scmp.eq.s32.totalorder %s43, 1
      %p202 = por %p200, %p201
      %p203 = scmp.ne.s32.totalorder %s194, %s195
      %p204 = scmp.eq.s32.totalorder %s43, 0
      %p205 = por %p203, %p204
      %p206 = scmp.ne.s32.totalorder %s194, %s195
      %p207 = scmp.eq.s32.totalorder %s44, 1
      %p208 = por %p206, %p207
      %p210 = scmp.ne.s32.totalorder %s195, %s209
      %p211 = scmp.eq.s32.totalorder %s44, 0
      %p212 = por %p210, %p211
      %s214 = sadd.s32 %s213, 1
      %p217 = scmp.eq.s32.totalorder %s38, 1
      %p218 = scmp.ne.s32.totalorder %s213, %s215
      %p219 = scmp.eq.s32.totalorder %s38, 0
      %p220 = por %p218, %p219
      %p221 = scmp.ne.s32.totalorder %s213, %s215
      %p222 = scmp.eq.s32.totalorder %s43, 1
      %p223 = por %p221, %p222
      %p224 = scmp.ne.s32.totalorder %s215, %s216
      %p225 = scmp.eq.s32.totalorder %s43, 0
      %p226 = por %p224, %p225
      %p227 = scmp.ne.s32.totalorder %s215, %s216
      %p228 = scmp.eq.s32.totalorder %s44, 1
      %p229 = por %p227, %p228
      %p231 = scmp.ne.s32.totalorder %s216, %s230
      %p232 = scmp.eq.s32.totalorder %s44, 0
      %p233 = por %p231, %p232
      %s235 = sadd.s32 %s234, 1
      %p238 = scmp.eq.s32.totalorder %s38, 1
      %p239 = scmp.ne.s32.totalorder %s234, %s236
      %p240 = scmp.eq.s32.totalorder %s38, 0
      %p241 = por %p239, %p240
      %p242 = scmp.ne.s32.totalorder %s234, %s236
      %p243 = scmp.eq.s32.totalorder %s43, 1
      %p244 = por %p242, %p243
      %p245 = scmp.ne.s32.totalorder %s236, %s237
      %p246 = scmp.eq.s32.totalorder %s43, 0
      %p247 = por %p245, %p246
      %p248 = scmp.ne.s32.totalorder %s236, %s237
      %p249 = scmp.eq.s32.totalorder %s44, 1
      %p250 = por %p248, %p249
      %p252 = scmp.ne.s32.totalorder %s237, %s251
      %p253 = scmp.eq.s32.totalorder %s44, 0
      %p254 = por %p252, %p253
      %s256 = sadd.s32 %s255, 1
      %p259 = scmp.eq.s32.totalorder %s38, 1
      %p260 = scmp.ne.s32.totalorder %s255, %s257
      %p261 = scmp.eq.s32.totalorder %s38, 0
      %p262 = por %p260, %p261
      %p263 = scmp.ne.s32.totalorder %s255, %s257
      %p264 = scmp.eq.s32.totalorder %s43, 1
      %p265 = por %p263, %p264
      %p266 = scmp.ne.s32.totalorder %s257, %s258
      %p267 = scmp.eq.s32.totalorder %s43, 0
      %p268 = por %p266, %p267
      %p269 = scmp.ne.s32.totalorder %s257, %s258
      %p270 = scmp.eq.s32.totalorder %s44, 1
      %p271 = por %p269, %p270
      %p273 = scmp.ne.s32.totalorder %s258, %s272
      %p274 = scmp.eq.s32.totalorder %s44, 0
      %p275 = por %p273, %p274
      %s277 = sadd.s32 %s276, 1
      %p280 = scmp.eq.s32.totalorder %s38, 1
      %p281 = scmp.ne.s32.totalorder %s276, %s278
      %p282 = scmp.eq.s32.totalorder %s38, 0
      %p283 = por %p281, %p282
      %p284 = scmp.ne.s32.totalorder %s276, %s278
      %p285 = scmp.eq.s32.totalorder %s43, 1
      %p286 = por %p284, %p285
      %p287 = scmp.ne.s32.totalorder %s278, %s279
      %p288 = scmp.eq.s32.totalorder %s43, 0
      %p289 = por %p287, %p288
      %p290 = scmp.ne.s32.totalorder %s278, %s279
      %p291 = scmp.eq.s32.totalorder %s44, 1
      %p292 = por %p290, %p291
      %p294 = scmp.ne.s32.totalorder %s279, %s293
      %p295 = scmp.eq.s32.totalorder %s44, 0
      %p296 = por %p294, %p295
      %s298 = sadd.s32 %s297, 1
      %p301 = scmp.eq.s32.totalorder %s38, 1
      %p302 = scmp.ne.s32.totalorder %s297, %s299
      %p303 = scmp.eq.s32.totalorder %s38, 0
      %p304 = por %p302, %p303
      %p305 = scmp.ne.s32.totalorder %s297, %s299
      %p306 = scmp.eq.s32.totalorder %s43, 1
      %p307 = por %p305, %p306
      %p308 = scmp.ne.s32.totalorder %s299, %s300
      %p309 = scmp.eq.s32.totalorder %s43, 0
      %p310 = por %p308, %p309
      %p311 = scmp.ne.s32.totalorder %s299, %s300
      %p312 = scmp.eq.s32.totalorder %s44, 1
      %p313 = por %p311, %p312
      %p315 = scmp.ne.s32.totalorder %s300, %s314
      %p316 = scmp.eq.s32.totalorder %s44, 0
      %p317 = por %p315, %p316
      %s319 = sadd.s32 %s318, 1
      %p322 = scmp.eq.s32.totalorder %s38, 1
      %p323 = scmp.ne.s32.totalorder %s318, %s320
      %p324 = scmp.eq.s32.totalorder %s38, 0
      %p325 = por %p323, %p324
      %p326 = scmp.ne.s32.totalorder %s318, %s320
      %p327 = scmp.eq.s32.totalorder %s43, 1
      %p328 = por %p326, %p327
      %p329 = scmp.ne.s32.totalorder %s320, %s321
      %p330 = scmp.eq.s32.totalorder %s43, 0
      %p331 = por %p329, %p330
      %p332 = scmp.ne.s32.totalorder %s320, %s321
      %p333 = scmp.eq.s32.totalorder %s44, 1
      %p334 = por %p332, %p333
      %p336 = scmp.ne.s32.totalorder %s321, %s335
      %p337 = scmp.eq.s32.totalorder %s44, 0
      %p338 = por %p336, %p337
      %s340 = sadd.s32 %s339, 1
      %p343 = scmp.eq.s32.totalorder %s38, 1
      %p344 = scmp.ne.s32.totalorder %s339, %s341
      %p345 = scmp.eq.s32.totalorder %s38, 0
      %p346 = por %p344, %p345
      %p347 = scmp.ne.s32.totalorder %s339, %s341
      %p348 = scmp.eq.s32.totalorder %s43, 1
      %p349 = por %p347, %p348
      %p350 = scmp.ne.s32.totalorder %s341, %s342
      %p351 = scmp.eq.s32.totalorder %s43, 0
      %p352 = por %p350, %p351
      %p353 = scmp.ne.s32.totalorder %s341, %s342
      %p354 = scmp.eq.s32.totalorder %s44, 1
      %p355 = por %p353, %p354
      %p357 = scmp.ne.s32.totalorder %s342, %s356
      %p358 = scmp.eq.s32.totalorder %s44, 0
      %p359 = por %p357, %p358
      %s361 = sadd.s32 %s360, 1
      %p364 = scmp.eq.s32.totalorder %s38, 1
      %p365 = scmp.ne.s32.totalorder %s360, %s362
      %p366 = scmp.eq.s32.totalorder %s38, 0
      %p367 = por %p365, %p366
      %p368 = scmp.ne.s32.totalorder %s360, %s362
      %p369 = scmp.eq.s32.totalorder %s43, 1
      %p370 = por %p368, %p369
      %p371 = scmp.ne.s32.totalorder %s362, %s363
      %p372 = scmp.eq.s32.totalorder %s43, 0
      %p373 = por %p371, %p372
      %p374 = scmp.ne.s32.totalorder %s362, %s363
      %p375 = scmp.eq.s32.totalorder %s44, 1
      %p376 = por %p374, %p375
      %p378 = scmp.ne.s32.totalorder %s363, %s377
      %p379 = scmp.eq.s32.totalorder %s44, 0
      %p380 = por %p378, %p379
      %s382 = sadd.s32 %s381, 1
      %p385 = scmp.eq.s32.totalorder %s38, 1
      %p386 = scmp.ne.s32.totalorder %s381, %s383
      %p387 = scmp.eq.s32.totalorder %s38, 0
      %p388 = por %p386, %p387
      %p389 = scmp.ne.s32.totalorder %s381, %s383
      %p390 = scmp.eq.s32.totalorder %s43, 1
      %p391 = por %p389, %p390
      %p392 = scmp.ne.s32.totalorder %s383, %s384
      %p393 = scmp.eq.s32.totalorder %s43, 0
      %p394 = por %p392, %p393
      %p395 = scmp.ne.s32.totalorder %s383, %s384
      %p396 = scmp.eq.s32.totalorder %s44, 1
      %p397 = por %p395, %p396
      %p399 = scmp.ne.s32.totalorder %s384, %s398
      %p400 = scmp.eq.s32.totalorder %s44, 0
      %p401 = por %p399, %p400
      %s403 = sadd.s32 %s402, 1
      %p406 = scmp.eq.s32.totalorder %s38, 1
      %p407 = scmp.ne.s32.totalorder %s402, %s404
      %p408 = scmp.eq.s32.totalorder %s38, 0
      %p409 = por %p407, %p408
      %p410 = scmp.ne.s32.totalorder %s402, %s404
      %p411 = scmp.eq.s32.totalorder %s43, 1
      %p412 = por %p410, %p411
      %p413 = scmp.ne.s32.totalorder %s404, %s405
      %p414 = scmp.eq.s32.totalorder %s43, 0
      %p415 = por %p413, %p414
      %p416 = scmp.ne.s32.totalorder %s404, %s405
      %p417 = scmp.eq.s32.totalorder %s44, 1
      %p418 = por %p416, %p417
      %p420 = scmp.ne.s32.totalorder %s405, %s419
      %p421 = scmp.eq.s32.totalorder %s44, 0
      %p422 = por %p420, %p421
      %s424 = sadd.s32 %s423, 1
      %p427 = scmp.eq.s32.totalorder %s38, 1
      %p428 = scmp.ne.s32.totalorder %s423, %s425
      %p429 = scmp.eq.s32.totalorder %s38, 0
      %p430 = por %p428, %p429
      %p431 = scmp.ne.s32.totalorder %s423, %s425
      %p432 = scmp.eq.s32.totalorder %s43, 1
      %p433 = por %p431, %p432
      %p434 = scmp.ne.s32.totalorder %s425, %s426
      %p435 = scmp.eq.s32.totalorder %s43, 0
      %p436 = por %p434, %p435
      %p437 = scmp.ne.s32.totalorder %s425, %s426
      %p438 = scmp.eq.s32.totalorder %s44, 1
      %p439 = por %p437, %p438
      %p441 = scmp.ne.s32.totalorder %s426, %s440
      %p442 = scmp.eq.s32.totalorder %s44, 0
      %p443 = por %p441, %p442
      %s445 = sadd.s32 %s444, 1
      %p448 = scmp.eq.s32.totalorder %s38, 1
      %p449 = scmp.ne.s32.totalorder %s444, %s446
      %p450 = scmp.eq.s32.totalorder %s38, 0
      %p451 = por %p449, %p450
      %p452 = scmp.ne.s32.totalorder %s444, %s446
      %p453 = scmp.eq.s32.totalorder %s43, 1
      %p454 = por %p452, %p453
      %p455 = scmp.ne.s32.totalorder %s446, %s447
      %p456 = scmp.eq.s32.totalorder %s43, 0
      %p457 = por %p455, %p456
      %p458 = scmp.ne.s32.totalorder %s446, %s447
      %p459 = scmp.eq.s32.totalorder %s44, 1
      %p460 = por %p458, %p459
      %p462 = scmp.ne.s32.totalorder %s447, %s461
      %p463 = scmp.eq.s32.totalorder %s44, 0
      %p464 = por %p462, %p463
      %s465 = ssub.s32 %s38, %s45
      %p466 = scmp.eq.s32.totalorder %s465, 0
      %s468 = sadd.s32 %s467, 1
      %s469 = scalar_select %p466, %s467, %s468
      %p472 = pneg %p466
      %p473 = scmp.eq.s32.totalorder %s38, 1
      %p474 = por %p472, %p473
      %p475 = scmp.ne.s32.totalorder %s467, %s470
      %p476 = scmp.eq.s32.totalorder %s38, 0
      %p477 = por %p475, %p476
      %p478 = scmp.ne.s32.totalorder %s467, %s470
      %p479 = scmp.eq.s32.totalorder %s43, 1
      %p480 = por %p478, %p479
      %p481 = scmp.ne.s32.totalorder %s470, %s471
      %p482 = scmp.eq.s32.totalorder %s43, 0
      %p483 = por %p481, %p482
      %p484 = scmp.ne.s32.totalorder %s470, %s471
      %p485 = scmp.eq.s32.totalorder %s44, 1
      %p486 = por %p484, %p485
      %p488 = scmp.ne.s32.totalorder %s471, %s487
      %p489 = scmp.eq.s32.totalorder %s44, 0
      %p490 = por %p488, %p489
      %p491 = scmp.le.s32.totalorder 1, %s38
      %p492 = scmp.lt.s32.totalorder %s38, 3
      %p493 = pnand %p491, %p492
      %p494 = pneg %p493
      // Predicated region
      $region9: #{tpu_custom_call.1} parent=5 // pred_check
        _
      $region10: #{tpu_custom_call.1} parent=5 // pred_check_branch
        %496 = sbr.rel (%p493) target = $region12
      $region11: #{tpu_custom_call.1} parent=5 // pred_region
        %s497 = ssub.s32 %s38, 1
        // Predicated region
        $region13: #{tpu_custom_call.1} parent=11 // pred_check
          %p498 = pneg %p163
        $region14: #{tpu_custom_call.1} parent=11 // pred_check_branch
          %500 = sbr.rel (%p498) target = $region16
        $region15: #{tpu_custom_call.1} parent=11 // pred_region
          %502 = vsyncadd [#allocation6], 0
          %s504 = sshll.u32 %s4, 4
          %s505 = int_to_ptr.hbm [resolvable:$true] %s504
          %s506 = sshll.u32 [#allocation5], 4
          %s507 = int_to_ptr.vmem [resolvable:$true] %s506
          %509 = dma.hbm_to_vmem [thread:$0]  %s505, 128, %s507, [#allocation6]
        $region16: #{tpu_custom_call.1} parent=11 // pred_fallthru
          _
        // Predicated region
        $region17: #{tpu_custom_call.1} parent=11 // pred_check
          %p510 = pneg %p184
        $region18: #{tpu_custom_call.1} parent=11 // pred_check_branch
          %512 = sbr.rel (%p510) target = $region20
        $region19: #{tpu_custom_call.1} parent=11 // pred_region
          %514 = vsyncadd [#allocation6], 0
          %s515 = sshll.u32 %s5, 4
          %s516 = int_to_ptr.hbm [resolvable:$true] %s515
          %s517 = sshll.u32 [#allocation7], 4
          %s518 = int_to_ptr.vmem [resolvable:$true] %s517
          %523 = dma.hbm_to_vmem [thread:$0]  %s516, 256, %s518, [#allocation6], 64, 64, 4
        $region20: #{tpu_custom_call.1} parent=11 // pred_fallthru
          _
        // Predicated region
        $region21: #{tpu_custom_call.1} parent=11 // pred_check
          %p524 = pneg %p205
        $region22: #{tpu_custom_call.1} parent=11 // pred_check_branch
          %526 = sbr.rel (%p524) target = $region24
        $region23: #{tpu_custom_call.1} parent=11 // pred_region
          %528 = vsyncadd [#allocation9], 0
          %s530 = sshll.u32 %s6, 4
          %s531 = int_to_ptr.hbm [resolvable:$true] %s530
          %s532 = sshll.u32 [#allocation8], 4
          %s533 = int_to_ptr.vmem [resolvable:$true] %s532
          %535 = dma.hbm_to_vmem [thread:$0]  %s531, 16, %s533, [#allocation9]
        $region24: #{tpu_custom_call.1} parent=11 // pred_fallthru
          _
        // Predicated region
        $region25: #{tpu_custom_call.1} parent=11 // pred_check
          %p536 = pneg %p226
        $region26: #{tpu_custom_call.1} parent=11 // pred_check_branch
          %538 = sbr.rel (%p536) target = $region28
        $region27: #{tpu_custom_call.1} parent=11 // pred_region
          %540 = vsyncadd [#allocation9], 0
          %s541 = sshll.u32 %s7, 4
          %s542 = int_to_ptr.hbm [resolvable:$true] %s541
          %s543 = sshll.u32 [#allocation10], 4
          %s544 = int_to_ptr.vmem [resolvable:$true] %s543
          %549 = dma.hbm_to_vmem [thread:$0]  %s542, 256, %s544, [#allocation9], 64, 64, 4
        $region28: #{tpu_custom_call.1} parent=11 // pred_fallthru
          _
        // Predicated region
        $region29: #{tpu_custom_call.1} parent=11 // pred_check
          %p550 = pneg %p247
        $region30: #{tpu_custom_call.1} parent=11 // pred_check_branch
          %552 = sbr.rel (%p550) target = $region32
        $region31: #{tpu_custom_call.1} parent=11 // pred_region
          %554 = vsyncadd [#allocation12], 0
          %s556 = sshll.u32 %s8, 4
          %s557 = int_to_ptr.hbm [resolvable:$true] %s556
          %s558 = sshll.u32 [#allocation11], 4
          %s559 = int_to_ptr.vmem [resolvable:$true] %s558
          %561 = dma.hbm_to_vmem [thread:$0]  %s557, 16, %s559, [#allocation12]
        $region32: #{tpu_custom_call.1} parent=11 // pred_fallthru
          _
        // Predicated region
        $region33: #{tpu_custom_call.1} parent=11 // pred_check
          %p562 = pneg %p268
        $region34: #{tpu_custom_call.1} parent=11 // pred_check_branch
          %564 = sbr.rel (%p562) target = $region36
        $region35: #{tpu_custom_call.1} parent=11 // pred_region
          %566 = vsyncadd [#allocation12], 0
          %s567 = sshll.u32 %s9, 4
          %s568 = int_to_ptr.hbm [resolvable:$true] %s567
          %s569 = sshll.u32 [#allocation13], 4
          %s570 = int_to_ptr.vmem [resolvable:$true] %s569
          %575 = dma.hbm_to_vmem [thread:$0]  %s568, 256, %s570, [#allocation12], 64, 64, 4
        $region36: #{tpu_custom_call.1} parent=11 // pred_fallthru
          _
        // Predicated region
        $region37: #{tpu_custom_call.1} parent=11 // pred_check
          %p576 = pneg %p289
        $region38: #{tpu_custom_call.1} parent=11 // pred_check_branch
          %578 = sbr.rel (%p576) target = $region40
        $region39: #{tpu_custom_call.1} parent=11 // pred_region
          %580 = vsyncadd [#allocation15], 0
          %s582 = sshll.u32 %s10, 4
          %s583 = int_to_ptr.hbm [resolvable:$true] %s582
          %s584 = sshll.u32 [#allocation14], 4
          %s585 = int_to_ptr.vmem [resolvable:$true] %s584
          %587 = dma.hbm_to_vmem [thread:$0]  %s583, 16, %s585, [#allocation15]
        $region40: #{tpu_custom_call.1} parent=11 // pred_fallthru
          _
        // Predicated region
        $region41: #{tpu_custom_call.1} parent=11 // pred_check
          %p588 = pneg %p310
        $region42: #{tpu_custom_call.1} parent=11 // pred_check_branch
          %590 = sbr.rel (%p588) target = $region44
        $region43: #{tpu_custom_call.1} parent=11 // pred_region
          %592 = vsyncadd [#allocation15], 0
          %s593 = sshll.u32 %s11, 4
          %s594 = int_to_ptr.hbm [resolvable:$true] %s593
          %s595 = sshll.u32 [#allocation16], 4
          %s596 = int_to_ptr.vmem [resolvable:$true] %s595
          %601 = dma.hbm_to_vmem [thread:$0]  %s594, 256, %s596, [#allocation15], 64, 64, 4
        $region44: #{tpu_custom_call.1} parent=11 // pred_fallthru
          _
        // Predicated region
        $region45: #{tpu_custom_call.1} parent=11 // pred_check
          %p602 = pneg %p331
        $region46: #{tpu_custom_call.1} parent=11 // pred_check_branch
          %604 = sbr.rel (%p602) target = $region48
        $region47: #{tpu_custom_call.1} parent=11 // pred_region
          %606 = vsyncadd [#allocation18], 0
          %s608 = sshll.u32 %s12, 4
          %s609 = int_to_ptr.hbm [resolvable:$true] %s608
          %s610 = sshll.u32 [#allocation17], 4
          %s611 = int_to_ptr.vmem [resolvable:$true] %s610
          %613 = dma.hbm_to_vmem [thread:$0]  %s609, 16, %s611, [#allocation18]
        $region48: #{tpu_custom_call.1} parent=11 // pred_fallthru
          _
        // Predicated region
        $region49: #{tpu_custom_call.1} parent=11 // pred_check
          %p614 = pneg %p352
        $region50: #{tpu_custom_call.1} parent=11 // pred_check_branch
          %616 = sbr.rel (%p614) target = $region52
        $region51: #{tpu_custom_call.1} parent=11 // pred_region
          %618 = vsyncadd [#allocation18], 0
          %s619 = sshll.u32 %s13, 4
          %s620 = int_to_ptr.hbm [resolvable:$true] %s619
          %s621 = sshll.u32 [#allocation19], 4
          %s622 = int_to_ptr.vmem [resolvable:$true] %s621
          %627 = dma.hbm_to_vmem [thread:$0]  %s620, 256, %s622, [#allocation18], 64, 64, 4
        $region52: #{tpu_custom_call.1} parent=11 // pred_fallthru
          _
        // Predicated region
        $region53: #{tpu_custom_call.1} parent=11 // pred_check
          %p628 = pneg %p373
        $region54: #{tpu_custom_call.1} parent=11 // pred_check_branch
          %630 = sbr.rel (%p628) target = $region56
        $region55: #{tpu_custom_call.1} parent=11 // pred_region
          %632 = vsyncadd [#allocation21], 0
          %s634 = sshll.u32 %s14, 4
          %s635 = int_to_ptr.hbm [resolvable:$true] %s634
          %s636 = sshll.u32 [#allocation20], 4
          %s637 = int_to_ptr.vmem [resolvable:$true] %s636
          %639 = dma.hbm_to_vmem [thread:$0]  %s635, 16, %s637, [#allocation21]
        $region56: #{tpu_custom_call.1} parent=11 // pred_fallthru
          _
        // Predicated region
        $region57: #{tpu_custom_call.1} parent=11 // pred_check
          %p640 = pneg %p394
        $region58: #{tpu_custom_call.1} parent=11 // pred_check_branch
          %642 = sbr.rel (%p640) target = $region60
        $region59: #{tpu_custom_call.1} parent=11 // pred_region
          %644 = vsyncadd [#allocation21], 0
          %s645 = sshll.u32 %s15, 4
          %s646 = int_to_ptr.hbm [resolvable:$true] %s645
          %s647 = sshll.u32 [#allocation22], 4
          %s648 = int_to_ptr.vmem [resolvable:$true] %s647
          %653 = dma.hbm_to_vmem [thread:$0]  %s646, 256, %s648, [#allocation21], 64, 64, 4
        $region60: #{tpu_custom_call.1} parent=11 // pred_fallthru
          _
        // Predicated region
        $region61: #{tpu_custom_call.1} parent=11 // pred_check
          %p654 = pneg %p415
        $region62: #{tpu_custom_call.1} parent=11 // pred_check_branch
          %656 = sbr.rel (%p654) target = $region64
        $region63: #{tpu_custom_call.1} parent=11 // pred_region
          %658 = vsyncadd [#allocation24], 0
          %s660 = sshll.u32 %s16, 4
          %s661 = int_to_ptr.hbm [resolvable:$true] %s660
          %s662 = sshll.u32 [#allocation23], 4
          %s663 = int_to_ptr.vmem [resolvable:$true] %s662
          %665 = dma.hbm_to_vmem [thread:$0]  %s661, 16, %s663, [#allocation24]
        $region64: #{tpu_custom_call.1} parent=11 // pred_fallthru
          _
        // Predicated region
        $region65: #{tpu_custom_call.1} parent=11 // pred_check
          %p666 = pneg %p436
        $region66: #{tpu_custom_call.1} parent=11 // pred_check_branch
          %668 = sbr.rel (%p666) target = $region68
        $region67: #{tpu_custom_call.1} parent=11 // pred_region
          _
        $region68: #{tpu_custom_call.1} parent=11 // pred_fallthru
          _
        // Predicated region
        $region69: #{tpu_custom_call.1} parent=11 // pred_check
          %p669 = pneg %p457
        $region70: #{tpu_custom_call.1} parent=11 // pred_check_branch
          %671 = sbr.rel (%p669) target = $region72
        $region71: #{tpu_custom_call.1} parent=11 // pred_region
          _
        $region72: #{tpu_custom_call.1} parent=11 // pred_fallthru
          _
      $region12: #{tpu_custom_call.1} parent=5 // pred_fallthru
        _
      %p672 = scmp.lt.s32.totalorder %s38, 2
      // Predicated region
      $region73: #{tpu_custom_call.1} parent=5 // pred_check
        %p673 = pneg %p672
      $region74: #{tpu_custom_call.1} parent=5 // pred_check_branch
        %675 = sbr.rel (%p673) target = $region76
      $region75: #{tpu_custom_call.1} parent=5 // pred_region
        // Predicated region
        $region77: #{tpu_custom_call.1} parent=75 // pred_check
          %p676 = pneg %p58
        $region78: #{tpu_custom_call.1} parent=75 // pred_check_branch
          %678 = sbr.rel (%p676) target = $region80
        $region79: #{tpu_custom_call.1} parent=75 // pred_region
          %p679 = scmp.lt.s32.totalorder %s38, 1
          %s680 = scalar_select %p679, %s38, 1
          %s681 = smul.addr %s680, 8
          %s682 = scalar_lea.vmem %s0, %s681
        $region80: #{tpu_custom_call.1} parent=75 // pred_fallthru
          _
        // Predicated region
        $region81: #{tpu_custom_call.1} parent=75 // pred_check
          %p683 = pneg %p84
        $region82: #{tpu_custom_call.1} parent=75 // pred_check_branch
          %685 = sbr.rel (%p683) target = $region84
        $region83: #{tpu_custom_call.1} parent=75 // pred_region
          %p686 = scmp.lt.s32.totalorder %s38, 1
          %s687 = scalar_select %p686, %s38, 1
          %s688 = smul.addr %s687, 8
          %s689 = scalar_lea.vmem %s1, %s688
        $region84: #{tpu_custom_call.1} parent=75 // pred_fallthru
          _
        // Predicated region
        $region85: #{tpu_custom_call.1} parent=75 // pred_check
          %p690 = pneg %p110
        $region86: #{tpu_custom_call.1} parent=75 // pred_check_branch
          %692 = sbr.rel (%p690) target = $region88
        $region87: #{tpu_custom_call.1} parent=75 // pred_region
          %p693 = scmp.lt.s32.totalorder %s38, 1
          %s694 = scalar_select %p693, %s38, 1
          %s695 = smul.addr %s694, 8
          %s696 = scalar_lea.vmem %s2, %s695
        $region88: #{tpu_custom_call.1} parent=75 // pred_fallthru
          _
        // Predicated region
        $region89: #{tpu_custom_call.1} parent=75 // pred_check
          %p697 = pneg %p136
        $region90: #{tpu_custom_call.1} parent=75 // pred_check_branch
          %699 = sbr.rel (%p697) target = $region92
        $region91: #{tpu_custom_call.1} parent=75 // pred_region
          %s700 = sand.u32 %s126, 1
          %s701 = scalar_lea.sflag [#allocation3], %s700
          %s702 = sand.u32 %s126, 1
          %s703 = smul.addr %s702, 8
          %s704 = scalar_lea.vmem [#allocation2], %s703
          %706 = vsyncadd %s701, 0
          %s707 = smul.addr %s38, 8
          %s708 = scalar_lea.hbm %s3, %s707
          %s710 = sshll.u32 %s708, 4
          %s711 = int_to_ptr.hbm [resolvable:$true] %s710
          %s712 = sshll.u32 %s704, 4
          %s713 = int_to_ptr.vmem [resolvable:$true] %s712
          %715 = dma.hbm_to_vmem [thread:$0]  %s711, 128, %s713, %s701
        $region92: #{tpu_custom_call.1} parent=75 // pred_fallthru
          _
      $region76: #{tpu_custom_call.1} parent=5 // pred_fallthru
        _
      %p716 = scmp.le.s32.totalorder 1, %s38
      %p717 = scmp.lt.s32.totalorder %s38, 3
      %p718 = pnand %p716, %p717
      %p719 = pneg %p718
      // Predicated region
      $region93: #{tpu_custom_call.1} parent=5 // pred_check
        _
      $region94: #{tpu_custom_call.1} parent=5 // pred_check_branch
        %721 = sbr.rel (%p718) target = $region96
      $region95: #{tpu_custom_call.1} parent=5 // pred_region
        %s722 = ssub.s32 %s38, 1
        %s723 = sand.u32 %s129, 1
        %s724 = scalar_lea.sflag [#allocation3], %s723
        %s725 = sand.u32 %s129, 1
        %s726 = smul.addr %s725, 8
        %s727 = scalar_lea.vmem [#allocation2], %s726
        // Predicated region
        $region97: #{tpu_custom_call.1} parent=95 // pred_check
          %p728 = pneg %p142
        $region98: #{tpu_custom_call.1} parent=95 // pred_check_branch
          %730 = sbr.rel (%p728) target = $region100
        $region99: #{tpu_custom_call.1} parent=95 // pred_region
          %732 = dma.done %s724, 128
        $region100: #{tpu_custom_call.1} parent=95 // pred_fallthru
          _
        // Predicated region
        $region101: #{tpu_custom_call.1} parent=95 // pred_check
          %p733 = pneg %p163
        $region102: #{tpu_custom_call.1} parent=95 // pred_check_branch
          %735 = sbr.rel (%p733) target = $region104
        $region103: #{tpu_custom_call.1} parent=95 // pred_region
          %737 = dma.done [#allocation6], 128
        $region104: #{tpu_custom_call.1} parent=95 // pred_fallthru
          _
        // Predicated region
        $region105: #{tpu_custom_call.1} parent=95 // pred_check
          %p738 = pneg %p184
        $region106: #{tpu_custom_call.1} parent=95 // pred_check_branch
          %740 = sbr.rel (%p738) target = $region108
        $region107: #{tpu_custom_call.1} parent=95 // pred_region
          %742 = dma.done [#allocation6], 256
        $region108: #{tpu_custom_call.1} parent=95 // pred_fallthru
          _
        // Predicated region
        $region109: #{tpu_custom_call.1} parent=95 // pred_check
          %p743 = pneg %p205
        $region110: #{tpu_custom_call.1} parent=95 // pred_check_branch
          %745 = sbr.rel (%p743) target = $region112
        $region111: #{tpu_custom_call.1} parent=95 // pred_region
          %747 = dma.done [#allocation9], 16
        $region112: #{tpu_custom_call.1} parent=95 // pred_fallthru
          _
        // Predicated region
        $region113: #{tpu_custom_call.1} parent=95 // pred_check
          %p748 = pneg %p226
        $region114: #{tpu_custom_call.1} parent=95 // pred_check_branch
          %750 = sbr.rel (%p748) target = $region116
        $region115: #{tpu_custom_call.1} parent=95 // pred_region
          %752 = dma.done [#allocation9], 256
        $region116: #{tpu_custom_call.1} parent=95 // pred_fallthru
          _
        // Predicated region
        $region117: #{tpu_custom_call.1} parent=95 // pred_check
          %p753 = pneg %p247
        $region118: #{tpu_custom_call.1} parent=95 // pred_check_branch
          %755 = sbr.rel (%p753) target = $region120
        $region119: #{tpu_custom_call.1} parent=95 // pred_region
          %757 = dma.done [#allocation12], 16
        $region120: #{tpu_custom_call.1} parent=95 // pred_fallthru
          _
        // Predicated region
        $region121: #{tpu_custom_call.1} parent=95 // pred_check
          %p758 = pneg %p268
        $region122: #{tpu_custom_call.1} parent=95 // pred_check_branch
          %760 = sbr.rel (%p758) target = $region124
        $region123: #{tpu_custom_call.1} parent=95 // pred_region
          %762 = dma.done [#allocation12], 256
        $region124: #{tpu_custom_call.1} parent=95 // pred_fallthru
          _
        // Predicated region
        $region125: #{tpu_custom_call.1} parent=95 // pred_check
          %p763 = pneg %p289
        $region126: #{tpu_custom_call.1} parent=95 // pred_check_branch
          %765 = sbr.rel (%p763) target = $region128
        $region127: #{tpu_custom_call.1} parent=95 // pred_region
          %767 = dma.done [#allocation15], 16
        $region128: #{tpu_custom_call.1} parent=95 // pred_fallthru
          _
        // Predicated region
        $region129: #{tpu_custom_call.1} parent=95 // pred_check
          %p768 = pneg %p310
        $region130: #{tpu_custom_call.1} parent=95 // pred_check_branch
          %770 = sbr.rel (%p768) target = $region132
        $region131: #{tpu_custom_call.1} parent=95 // pred_region
          %772 = dma.done [#allocation15], 256
        $region132: #{tpu_custom_call.1} parent=95 // pred_fallthru
          _
        // Predicated region
        $region133: #{tpu_custom_call.1} parent=95 // pred_check
          %p773 = pneg %p331
        $region134: #{tpu_custom_call.1} parent=95 // pred_check_branch
          %775 = sbr.rel (%p773) target = $region136
        $region135: #{tpu_custom_call.1} parent=95 // pred_region
          %777 = dma.done [#allocation18], 16
        $region136: #{tpu_custom_call.1} parent=95 // pred_fallthru
          _
        // Predicated region
        $region137: #{tpu_custom_call.1} parent=95 // pred_check
          %p778 = pneg %p352
        $region138: #{tpu_custom_call.1} parent=95 // pred_check_branch
          %780 = sbr.rel (%p778) target = $region140
        $region139: #{tpu_custom_call.1} parent=95 // pred_region
          %782 = dma.done [#allocation18], 256
        $region140: #{tpu_custom_call.1} parent=95 // pred_fallthru
          _
        // Predicated region
        $region141: #{tpu_custom_call.1} parent=95 // pred_check
          %p783 = pneg %p373
        $region142: #{tpu_custom_call.1} parent=95 // pred_check_branch
          %785 = sbr.rel (%p783) target = $region144
        $region143: #{tpu_custom_call.1} parent=95 // pred_region
          %787 = dma.done [#allocation21], 16
        $region144: #{tpu_custom_call.1} parent=95 // pred_fallthru
          _
        // Predicated region
        $region145: #{tpu_custom_call.1} parent=95 // pred_check
          %p788 = pneg %p394
        $region146: #{tpu_custom_call.1} parent=95 // pred_check_branch
          %790 = sbr.rel (%p788) target = $region148
        $region147: #{tpu_custom_call.1} parent=95 // pred_region
          %792 = dma.done [#allocation21], 256
        $region148: #{tpu_custom_call.1} parent=95 // pred_fallthru
          _
        // Predicated region
        $region149: #{tpu_custom_call.1} parent=95 // pred_check
          %p793 = pneg %p415
        $region150: #{tpu_custom_call.1} parent=95 // pred_check_branch
          %795 = sbr.rel (%p793) target = $region152
        $region151: #{tpu_custom_call.1} parent=95 // pred_region
          %797 = dma.done [#allocation24], 16
        $region152: #{tpu_custom_call.1} parent=95 // pred_fallthru
          _
        %p798 = scmp.lt.s32.totalorder %s43, 1
        %s799 = scalar_select %p798, %s43, 1
        %s800 = smul.addr %s799, 8
        %s801 = scalar_lea.vmem %s0, %s800
        %p802 = pneg %p64
        %p803 = pneg %p61
        %p804 = scmp.lt.s32.totalorder %s43, 1
        %s805 = scalar_select %p804, %s43, 1
        %s806 = smul.addr %s805, 8
        %s807 = scalar_lea.vmem %s1, %s806
        %p808 = pneg %p90
        %p809 = pneg %p87
        %p810 = scmp.lt.s32.totalorder %s43, 1
        %s811 = scalar_select %p810, %s43, 1
        %s812 = smul.addr %s811, 8
        %s813 = scalar_lea.vmem %s2, %s812
        %p814 = pneg %p116
        %p815 = pneg %p113
        %s816 = sand.u32 %s129, 1
        %s817 = scalar_lea.sflag [#allocation3], %s816
        %s818 = sand.u32 %s129, 1
        %s819 = smul.addr %s818, 8
        %s820 = scalar_lea.vmem [#allocation2], %s819
        %p821 = pneg %p142
        %p822 = pneg %p139
        %p823 = pneg %p163
        %p824 = pneg %p160
        %p825 = pneg %p184
        %p826 = pneg %p181
        %p827 = pneg %p205
        %p828 = pneg %p202
        %p829 = pneg %p226
        %p830 = pneg %p223
        %p831 = pneg %p247
        %p832 = pneg %p244
        %p833 = pneg %p268
        %p834 = pneg %p265
        %p835 = pneg %p289
        %p836 = pneg %p286
        %p837 = pneg %p310
        %p838 = pneg %p307
        %p839 = pneg %p331
        %p840 = pneg %p328
        %p841 = pneg %p352
        %p842 = pneg %p349
        %p843 = pneg %p373
        %p844 = pneg %p370
        %p845 = pneg %p394
        %p846 = pneg %p391
        %p847 = pneg %p415
        %p848 = pneg %p412
        %p849 = pneg %p436
        %p850 = pneg %p433
        %p851 = pneg %p457
        %p852 = pneg %p454
        %p853 = pneg %p483
        %p854 = pneg %p480
        %s855 = sand.u32 %s470, 1
        %s856 = scalar_lea.sflag [#allocation4], %s855
        %s857 = sand.u32 %s470, 1
        %s858 = smul.addr %s857, 8
        %s859 = scalar_lea.vmem [#allocation25], %s858
        %p860 = scmp.lt.s32.totalorder %s43, 1
        %s861 = scalar_select %p860, %s43, 1
        %s862 = smul.addr %s861, 8
        %s863 = scalar_lea.vmem %s0, %s862
        %p864 = scmp.lt.s32.totalorder %s43, 1
        %s865 = scalar_select %p864, %s43, 1
        %s866 = smul.addr %s865, 8
        %s867 = scalar_lea.vmem %s1, %s866
        %p868 = scmp.lt.s32.totalorder %s43, 1
        %s869 = scalar_select %p868, %s43, 1
        %s870 = smul.addr %s869, 8
        %s871 = scalar_lea.vmem %s2, %s870
        %v873 = vld [vmem:[%s863] sm:$0xff]
        %v874 = vld [vmem:[#allocation5] sm:$0x1]
        %v875 = vld [vmem:[#allocation5 + $0x1] sm:$0x1]
        %vm876 = vcmask 261120
        %v877 = vsel %vm876, %v873, 0.0
        %878 = vadd.xlane.f32.xlu0 %v877
        %v879 = vpop.xlane.xlu0 %878
        %v880 = vrcp.pop 32.0
        %v881 = vmul.f32 32.0, %v880
        %v882 = vsub.f32 1.0, %v881
        %v883 = vmul.f32 %v880, %v882
        %v884 = vadd.f32 %v880, %v883
        %vm885 = vweird.f32 %v880
        %v886 = vsel %vm885, %v880, %v884
        %v887 = vmul.f32 %v879, %v886
        %v888 = vmul.f32 %v873, %v873
        %v889 = vsel %vm876, %v888, 0.0
        %890 = vadd.xlane.f32.xlu0 %v889
        %v891 = vpop.xlane.xlu0 %890
        %v892 = vmul.f32 %v891, %v886
        %v893 = vmul.f32 %v887, %v887
        %v894 = vsub.f32 %v892, %v893
        %v895 = vsub.f32 %v873, %v887
        %v896 = vadd.f32 %v894, 1e-05
        %v897 = vrsqrt.pop %v896
        %v898 = vmul.f32 %v897, %v896
        %v899 = vmul.f32 %v898, %v897
        %v900 = vmul.f32 0.5, %v899
        %v901 = vsub.f32 1.5, %v900
        %v902 = vmul.f32 %v897, %v901
        %vm903 = vweird.f32 %v896
        %vm904 = vweird.f32 %v897
        %vm905 = vmor %vm903, %vm904
        %v906 = vsel %vm905, %v897, %v902
        %v907 = vmul.f32 %v895, %v906
        %v908 = vperm.slane %v874, 0
        %v909 = vmul.f32 %v907, %v908
        %v910 = vperm.slane %v875, 0
        %v911 = vadd.f32 %v909, %v910
        %v912 = vpack.c.bf16 %v911, %v911
        %v913 = vld [vmem:[#allocation7] sm:$0xf]
        %v914 = vld [vmem:[#allocation7 + $0x4] sm:$0xf]
        %v915 = vld [vmem:[#allocation7 + $0x8] sm:$0xf]
        %v916 = vld [vmem:[#allocation7 + $0xc] sm:$0xf]
        %v917 = vld [vmem:[#allocation8] sm:$0x1]
        %v919 = vperm.slane %v917, 0
        %v925 = vunpack.c.l.b16 %v913
        %v926 = vunpack.c.l.b16 %v914
        %v927 = vunpack.c.l.b16 %v915
        %v928 = vunpack.c.l.b16 %v916
        %v929 = vpack.c.b16 %v926, %v925
        %v930 = vpack.c.b16 %v928, %v927
        %v934 = vsel %vm876, %v912, 0
        %936 = vmatpush.bf16.msra.mxu0 0
        %937 = vmatpush.bf16.msra.mxu0 0
        %938 = vmatpush.bf16.msra.mxu0 0
        %939 = vmatpush.bf16.msra.mxu0 0
        %940 = vmatpush.bf16.msra.mxu0 0
        %941 = vmatpush.bf16.msra.mxu0 0
        %942 = vmatpush.bf16.msra.mxu0 %v930
        %943 = vmatpush.bf16.msra.mxu0 %v929
        %944 = vmatmul.bf16.gmra.mxu0 %v934
        %v945 = vpop.f32.mrf.mxu0
        %v946 = vadd.f32 %v919, %v945
        %v947 = vpop.f32.mrf.mxu0
        %948 = vdwg.mxu0
        %v949 = vld [vmem:[%s871] sm:$0xff]
        %v950 = vsub.f32 %v949, 1.0
        %v951 = vmul.f32 %v950, 1e+09
        %953 = vrot.lane.b32.xlu0 %v946, 120
        %v954 = vpop.permute.xlu0 %953
        %956 = vrot.lane.b32.xlu0 %v946, 112
        %v957 = vpop.permute.xlu0 %956
        %959 = vrot.lane.b32.xlu0 %v946, 104
        %v960 = vpop.permute.xlu0 %959
        %v962 = vrot.slane %v957, 4
        %vm963 = vcmask 1047556
        %v964 = vsel %vm963, %v962, %v946
        %v965 = vrot.slane %v946, 4
        %v966 = vsel %vm963, %v957, %v965
        %v968 = vunpack.c.l.s4 1983009808
        %v969 = vunpack.c.0.s8 %v968
        %v970 = vperm.slane %v964, %v969
        %v972 = vunpack.c.l.s4 1983009808
        %v973 = vunpack.c.0.s8 %v972
        %v974 = vperm.slane %v966, %v973
        %v975 = vrot.slane %v960, 4
        %v976 = vsel %vm963, %v975, %v954
        %v977 = vrot.slane %v954, 4
        %v978 = vsel %vm963, %v960, %v977
        %v980 = vunpack.c.l.s4 1983009808
        %v981 = vunpack.c.0.s8 %v980
        %v982 = vperm.slane %v976, %v981
        %v984 = vunpack.c.l.s4 1983009808
        %v985 = vunpack.c.0.s8 %v984
        %v986 = vperm.slane %v978, %v985
        %v987 = vrot.slane %v982, 4
        %v988 = vsel %vm963, %v987, %v970
        %v989 = vrot.slane %v970, 4
        %v990 = vsel %vm963, %v982, %v989
        %v992 = vunpack.c.l.s4 1934713408
        %v993 = vunpack.c.0.s8 %v992
        %v994 = vperm.slane %v988, %v993
        %v996 = vunpack.c.l.s4 1934713408
        %v997 = vunpack.c.0.s8 %v996
        %v998 = vperm.slane %v990, %v997
        %v999 = vrot.slane %v986, 4
        %v1000 = vsel %vm963, %v999, %v974
        %v1001 = vrot.slane %v974, 4
        %v1002 = vsel %vm963, %v986, %v1001
        %v1004 = vunpack.c.l.s4 1934713408
        %v1005 = vunpack.c.0.s8 %v1004
        %v1006 = vperm.slane %v1000, %v1005
        %v1008 = vunpack.c.l.s4 1934713408
        %v1009 = vunpack.c.0.s8 %v1008
        %v1010 = vperm.slane %v1002, %v1009
        %v1011 = vrot.slane %v994, 4
        %v1012 = vsel %vm963, 0.0, %v1011
        %v1013 = vrot.slane %v998, 4
        %v1014 = vsel %vm963, 0.0, %v1013
        %v1015 = vrot.slane %v1006, 4
        %v1016 = vsel %vm963, 0.0, %v1015
        %v1017 = vrot.slane %v1010, 4
        %v1018 = vsel %vm963, 0.0, %v1017
        %v1019 = vsel %vm963, %v1013, %v994
        %v1021 = vunpack.c.l.s4 1983009808
        %v1022 = vunpack.c.0.s8 %v1021
        %v1023 = vperm.slane %v1019, %v1022
        %v1024 = vrot.slane %v1014, 4
        %v1025 = vsel %vm963, %v1024, %v1012
        %v1027 = vunpack.c.l.s4 1983009808
        %v1028 = vunpack.c.0.s8 %v1027
        %v1029 = vperm.slane %v1025, %v1028
        %v1030 = vsel %vm963, %v1017, %v1006
        %v1032 = vunpack.c.l.s4 1983009808
        %v1033 = vunpack.c.0.s8 %v1032
        %v1034 = vperm.slane %v1030, %v1033
        %v1035 = vrot.slane %v1018, 4
        %v1036 = vsel %vm963, %v1035, %v1016
        %v1038 = vunpack.c.l.s4 1983009808
        %v1039 = vunpack.c.0.s8 %v1038
        %v1040 = vperm.slane %v1036, %v1039
        %v1041 = vrot.slane %v1029, 4
        %v1042 = vsel %vm963, %v1041, %v1023
        %v1043 = vrot.slane %v1023, 4
        %v1044 = vsel %vm963, %v1029, %v1043
        %v1046 = vunpack.c.l.s4 1934713408
        %v1047 = vunpack.c.0.s8 %v1046
        %v1048 = vperm.slane %v1042, %v1047
        %v1050 = vunpack.c.l.s4 1934713408
        %v1051 = vunpack.c.0.s8 %v1050
        %v1052 = vperm.slane %v1044, %v1051
        %v1053 = vrot.slane %v1040, 4
        %v1054 = vsel %vm963, %v1053, %v1034
        %v1055 = vrot.slane %v1034, 4
        %v1056 = vsel %vm963, %v1040, %v1055
        %v1058 = vunpack.c.l.s4 1934713408
        %v1059 = vunpack.c.0.s8 %v1058
        %v1060 = vperm.slane %v1054, %v1059
        %v1062 = vunpack.c.l.s4 1934713408
        %v1063 = vunpack.c.0.s8 %v1062
        %v1064 = vperm.slane %v1056, %v1063
        %v1065 = vrot.slane %v1060, 4
        %v1066 = vsel %vm963, %v1065, %v1048
        %v1067 = vrot.slane %v1048, 4
        %v1068 = vsel %vm963, %v1060, %v1067
        %v1069 = vrot.slane %v1064, 4
        %v1070 = vsel %vm963, %v1069, %v1052
        %v1071 = vrot.slane %v1052, 4
        %v1072 = vsel %vm963, %v1064, %v1071
        %v1073 = vpack.c.bf16 %v1066, %v1066
        %v1074 = vpack.c.bf16 %v1068, %v1068
        %v1075 = vpack.c.bf16 %v1070, %v1070
        %v1076 = vpack.c.bf16 %v1072, %v1072
        %1077 = vrot.lane.b32.xlu0 %v946, 96
        %v1078 = vpop.permute.xlu0 %1077
        %1079 = vrot.lane.b32.xlu0 %v954, 96
        %v1080 = vpop.permute.xlu0 %1079
        %1081 = vrot.lane.b32.xlu0 %v957, 96
        %v1082 = vpop.permute.xlu0 %1081
        %1083 = vrot.lane.b32.xlu0 %v960, 96
        %v1084 = vpop.permute.xlu0 %1083
        %v1089 = vrot.slane %v1082, 4
        %v1090 = vsel %vm963, %v1089, %v1078
        %v1091 = vrot.slane %v1078, 4
        %v1092 = vsel %vm963, %v1082, %v1091
        %v1094 = vunpack.c.l.s4 1983009808
        %v1095 = vunpack.c.0.s8 %v1094
        %v1096 = vperm.slane %v1090, %v1095
        %v1098 = vunpack.c.l.s4 1983009808
        %v1099 = vunpack.c.0.s8 %v1098
        %v1100 = vperm.slane %v1092, %v1099
        %v1101 = vrot.slane %v1084, 4
        %v1102 = vsel %vm963, %v1101, %v1080
        %v1103 = vrot.slane %v1080, 4
        %v1104 = vsel %vm963, %v1084, %v1103
        %v1106 = vunpack.c.l.s4 1983009808
        %v1107 = vunpack.c.0.s8 %v1106
        %v1108 = vperm.slane %v1102, %v1107
        %v1110 = vunpack.c.l.s4 1983009808
        %v1111 = vunpack.c.0.s8 %v1110
        %v1112 = vperm.slane %v1104, %v1111
        %v1113 = vrot.slane %v1108, 4
        %v1114 = vsel %vm963, %v1113, %v1096
        %v1115 = vrot.slane %v1096, 4
        %v1116 = vsel %vm963, %v1108, %v1115
        %v1118 = vunpack.c.l.s4 1934713408
        %v1119 = vunpack.c.0.s8 %v1118
        %v1120 = vperm.slane %v1114, %v1119
        %v1122 = vunpack.c.l.s4 1934713408
        %v1123 = vunpack.c.0.s8 %v1122
        %v1124 = vperm.slane %v1116, %v1123
        %v1125 = vrot.slane %v1112, 4
        %v1126 = vsel %vm963, %v1125, %v1100
        %v1127 = vrot.slane %v1100, 4
        %v1128 = vsel %vm963, %v1112, %v1127
        %v1130 = vunpack.c.l.s4 1934713408
        %v1131 = vunpack.c.0.s8 %v1130
        %v1132 = vperm.slane %v1126, %v1131
        %v1134 = vunpack.c.l.s4 1934713408
        %v1135 = vunpack.c.0.s8 %v1134
        %v1136 = vperm.slane %v1128, %v1135
        %v1137 = vrot.slane %v1120, 4
        %v1138 = vsel %vm963, 0.0, %v1137
        %v1139 = vrot.slane %v1124, 4
        %v1140 = vsel %vm963, 0.0, %v1139
        %v1141 = vrot.slane %v1132, 4
        %v1142 = vsel %vm963, 0.0, %v1141
        %v1143 = vrot.slane %v1136, 4
        %v1144 = vsel %vm963, 0.0, %v1143
        %v1145 = vsel %vm963, %v1139, %v1120
        %v1147 = vunpack.c.l.s4 1983009808
        %v1148 = vunpack.c.0.s8 %v1147
        %v1149 = vperm.slane %v1145, %v1148
        %v1150 = vrot.slane %v1140, 4
        %v1151 = vsel %vm963, %v1150, %v1138
        %v1153 = vunpack.c.l.s4 1983009808
        %v1154 = vunpack.c.0.s8 %v1153
        %v1155 = vperm.slane %v1151, %v1154
        %v1156 = vsel %vm963, %v1143, %v1132
        %v1158 = vunpack.c.l.s4 1983009808
        %v1159 = vunpack.c.0.s8 %v1158
        %v1160 = vperm.slane %v1156, %v1159
        %v1161 = vrot.slane %v1144, 4
        %v1162 = vsel %vm963, %v1161, %v1142
        %v1164 = vunpack.c.l.s4 1983009808
        %v1165 = vunpack.c.0.s8 %v1164
        %v1166 = vperm.slane %v1162, %v1165
        %v1167 = vrot.slane %v1155, 4
        %v1168 = vsel %vm963, %v1167, %v1149
        %v1169 = vrot.slane %v1149, 4
        %v1170 = vsel %vm963, %v1155, %v1169
        %v1172 = vunpack.c.l.s4 1934713408
        %v1173 = vunpack.c.0.s8 %v1172
        %v1174 = vperm.slane %v1168, %v1173
        %v1176 = vunpack.c.l.s4 1934713408
        %v1177 = vunpack.c.0.s8 %v1176
        %v1178 = vperm.slane %v1170, %v1177
        %v1179 = vrot.slane %v1166, 4
        %v1180 = vsel %vm963, %v1179, %v1160
        %v1181 = vrot.slane %v1160, 4
        %v1182 = vsel %vm963, %v1166, %v1181
        %v1184 = vunpack.c.l.s4 1934713408
        %v1185 = vunpack.c.0.s8 %v1184
        %v1186 = vperm.slane %v1180, %v1185
        %v1188 = vunpack.c.l.s4 1934713408
        %v1189 = vunpack.c.0.s8 %v1188
        %v1190 = vperm.slane %v1182, %v1189
        %v1191 = vrot.slane %v1186, 4
        %v1192 = vsel %vm963, %v1191, %v1174
        %v1193 = vrot.slane %v1174, 4
        %v1194 = vsel %vm963, %v1186, %v1193
        %v1195 = vrot.slane %v1190, 4
        %v1196 = vsel %vm963, %v1195, %v1178
        %v1197 = vrot.slane %v1178, 4
        %v1198 = vsel %vm963, %v1190, %v1197
        %v1199 = vpack.c.bf16 %v1192, %v1192
        %v1200 = vpack.c.bf16 %v1194, %v1194
        %v1201 = vpack.c.bf16 %v1196, %v1196
        %v1202 = vpack.c.bf16 %v1198, %v1198
        %1203 = vrot.lane.b32.xlu0 %v946, 64
        %v1204 = vpop.permute.xlu0 %1203
        %1205 = vrot.lane.b32.xlu0 %v954, 64
        %v1206 = vpop.permute.xlu0 %1205
        %1207 = vrot.lane.b32.xlu0 %v957, 64
        %v1208 = vpop.permute.xlu0 %1207
        %1209 = vrot.lane.b32.xlu0 %v960, 64
        %v1210 = vpop.permute.xlu0 %1209
        %v1215 = vrot.slane %v1208, 4
        %v1216 = vsel %vm963, %v1215, %v1204
        %v1217 = vrot.slane %v1204, 4
        %v1218 = vsel %vm963, %v1208, %v1217
        %v1220 = vunpack.c.l.s4 1983009808
        %v1221 = vunpack.c.0.s8 %v1220
        %v1222 = vperm.slane %v1216, %v1221
        %v1224 = vunpack.c.l.s4 1983009808
        %v1225 = vunpack.c.0.s8 %v1224
        %v1226 = vperm.slane %v1218, %v1225
        %v1227 = vrot.slane %v1210, 4
        %v1228 = vsel %vm963, %v1227, %v1206
        %v1229 = vrot.slane %v1206, 4
        %v1230 = vsel %vm963, %v1210, %v1229
        %v1232 = vunpack.c.l.s4 1983009808
        %v1233 = vunpack.c.0.s8 %v1232
        %v1234 = vperm.slane %v1228, %v1233
        %v1236 = vunpack.c.l.s4 1983009808
        %v1237 = vunpack.c.0.s8 %v1236
        %v1238 = vperm.slane %v1230, %v1237
        %v1239 = vrot.slane %v1234, 4
        %v1240 = vsel %vm963, %v1239, %v1222
        %v1241 = vrot.slane %v1222, 4
        %v1242 = vsel %vm963, %v1234, %v1241
        %v1244 = vunpack.c.l.s4 1934713408
        %v1245 = vunpack.c.0.s8 %v1244
        %v1246 = vperm.slane %v1240, %v1245
        %v1248 = vunpack.c.l.s4 1934713408
        %v1249 = vunpack.c.0.s8 %v1248
        %v1250 = vperm.slane %v1242, %v1249
        %v1251 = vrot.slane %v1238, 4
        %v1252 = vsel %vm963, %v1251, %v1226
        %v1253 = vrot.slane %v1226, 4
        %v1254 = vsel %vm963, %v1238, %v1253
        %v1256 = vunpack.c.l.s4 1934713408
        %v1257 = vunpack.c.0.s8 %v1256
        %v1258 = vperm.slane %v1252, %v1257
        %v1260 = vunpack.c.l.s4 1934713408
        %v1261 = vunpack.c.0.s8 %v1260
        %v1262 = vperm.slane %v1254, %v1261
        %v1263 = vrot.slane %v1246, 4
        %v1264 = vsel %vm963, 0.0, %v1263
        %v1265 = vrot.slane %v1250, 4
        %v1266 = vsel %vm963, 0.0, %v1265
        %v1267 = vrot.slane %v1258, 4
        %v1268 = vsel %vm963, 0.0, %v1267
        %v1269 = vrot.slane %v1262, 4
        %v1270 = vsel %vm963, 0.0, %v1269
        %v1271 = vsel %vm963, %v1265, %v1246
        %v1273 = vunpack.c.l.s4 1983009808
        %v1274 = vunpack.c.0.s8 %v1273
        %v1275 = vperm.slane %v1271, %v1274
        %v1276 = vrot.slane %v1266, 4
        %v1277 = vsel %vm963, %v1276, %v1264
        %v1279 = vunpack.c.l.s4 1983009808
        %v1280 = vunpack.c.0.s8 %v1279
        %v1281 = vperm.slane %v1277, %v1280
        %v1282 = vsel %vm963, %v1269, %v1258
        %v1284 = vunpack.c.l.s4 1983009808
        %v1285 = vunpack.c.0.s8 %v1284
        %v1286 = vperm.slane %v1282, %v1285
        %v1287 = vrot.slane %v1270, 4
        %v1288 = vsel %vm963, %v1287, %v1268
        %v1290 = vunpack.c.l.s4 1983009808
        %v1291 = vunpack.c.0.s8 %v1290
        %v1292 = vperm.slane %v1288, %v1291
        %v1293 = vrot.slane %v1281, 4
        %v1294 = vsel %vm963, %v1293, %v1275
        %v1295 = vrot.slane %v1275, 4
        %v1296 = vsel %vm963, %v1281, %v1295
        %v1298 = vunpack.c.l.s4 1934713408
        %v1299 = vunpack.c.0.s8 %v1298
        %v1300 = vperm.slane %v1294, %v1299
        %v1302 = vunpack.c.l.s4 1934713408
        %v1303 = vunpack.c.0.s8 %v1302
        %v1304 = vperm.slane %v1296, %v1303
        %v1305 = vrot.slane %v1292, 4
        %v1306 = vsel %vm963, %v1305, %v1286
        %v1307 = vrot.slane %v1286, 4
        %v1308 = vsel %vm963, %v1292, %v1307
        %v1310 = vunpack.c.l.s4 1934713408
        %v1311 = vunpack.c.0.s8 %v1310
        %v1312 = vperm.slane %v1306, %v1311
        %v1314 = vunpack.c.l.s4 1934713408
        %v1315 = vunpack.c.0.s8 %v1314
        %v1316 = vperm.slane %v1308, %v1315
        %v1317 = vrot.slane %v1312, 4
        %v1318 = vsel %vm963, %v1317, %v1300
        %v1319 = vrot.slane %v1300, 4
        %v1320 = vsel %vm963, %v1312, %v1319
        %v1321 = vrot.slane %v1316, 4
        %v1322 = vsel %vm963, %v1321, %v1304
        %v1323 = vrot.slane %v1304, 4
        %v1324 = vsel %vm963, %v1316, %v1323
        %v1325 = vpack.c.bf16 %v1318, %v1318
        %v1326 = vpack.c.bf16 %v1320, %v1320
        %v1327 = vpack.c.bf16 %v1322, %v1322
        %v1328 = vpack.c.bf16 %v1324, %v1324
        %vm1329 = vcmask 64512
        %v1331 = vsel %vm1329, %v1073, 0
        %v1334 = vsel %vm1329, %v1199, 0
        %1336 = vmatpush.bf16.xpose.msra.mxu0 0
        %1337 = vmatpush.bf16.xpose.msra.mxu0 0
        %1338 = vmatpush.bf16.xpose.msra.mxu0 0
        %1339 = vmatpush.bf16.xpose.msra.mxu0 0
        %1340 = vmatpush.bf16.xpose.msra.mxu0 0
        %1341 = vmatpush.bf16.xpose.msra.mxu0 0
        %1342 = vmatpush.bf16.xpose.msra.mxu0 0
        %1343 = vmatpush.bf16.xpose.msra.mxu0 %v1334
        %1344 = vmatmul.bf16.gmra.mxu0 %v1331
        %v1345 = vpop.f32.mrf.mxu0
        %v1346 = vadd.f32 0.0, %v1345
        %v1347 = vpop.f32.mrf.mxu0
        %1348 = vdwg.mxu0
        %v1350 = vsel %vm1329, %v1074, 0
        %v1353 = vsel %vm1329, %v1200, 0
        %1355 = vmatpush.bf16.xpose.msra.mxu0 0
        %1356 = vmatpush.bf16.xpose.msra.mxu0 0
        %1357 = vmatpush.bf16.xpose.msra.mxu0 0
        %1358 = vmatpush.bf16.xpose.msra.mxu0 0
        %1359 = vmatpush.bf16.xpose.msra.mxu0 0
        %1360 = vmatpush.bf16.xpose.msra.mxu0 0
        %1361 = vmatpush.bf16.xpose.msra.mxu0 0
        %1362 = vmatpush.bf16.xpose.msra.mxu0 %v1353
        %1363 = vmatmul.bf16.gmra.mxu0 %v1350
        %v1364 = vpop.f32.mrf.mxu0
        %v1365 = vadd.f32 0.0, %v1364
        %v1366 = vpop.f32.mrf.mxu0
        %1367 = vdwg.mxu0
        %v1369 = vsel %vm1329, %v1075, 0
        %v1372 = vsel %vm1329, %v1201, 0
        %1374 = vmatpush.bf16.xpose.msra.mxu0 0
        %1375 = vmatpush.bf16.xpose.msra.mxu0 0
        %1376 = vmatpush.bf16.xpose.msra.mxu0 0
        %1377 = vmatpush.bf16.xpose.msra.mxu0 0
        %1378 = vmatpush.bf16.xpose.msra.mxu0 0
        %1379 = vmatpush.bf16.xpose.msra.mxu0 0
        %1380 = vmatpush.bf16.xpose.msra.mxu0 0
        %1381 = vmatpush.bf16.xpose.msra.mxu0 %v1372
        %1382 = vmatmul.bf16.gmra.mxu0 %v1369
        %v1383 = vpop.f32.mrf.mxu0
        %v1384 = vadd.f32 0.0, %v1383
        %v1385 = vpop.f32.mrf.mxu0
        %1386 = vdwg.mxu0
        %v1388 = vsel %vm1329, %v1076, 0
        %v1391 = vsel %vm1329, %v1202, 0
        %1393 = vmatpush.bf16.xpose.msra.mxu0 0
        %1394 = vmatpush.bf16.xpose.msra.mxu0 0
        %1395 = vmatpush.bf16.xpose.msra.mxu0 0
        %1396 = vmatpush.bf16.xpose.msra.mxu0 0
        %1397 = vmatpush.bf16.xpose.msra.mxu0 0
        %1398 = vmatpush.bf16.xpose.msra.mxu0 0
        %1399 = vmatpush.bf16.xpose.msra.mxu0 0
        %1400 = vmatpush.bf16.xpose.msra.mxu0 %v1391
        %1401 = vmatmul.bf16.gmra.mxu0 %v1388
        %v1402 = vpop.f32.mrf.mxu0
        %v1403 = vadd.f32 0.0, %v1402
        %v1404 = vpop.f32.mrf.mxu0
        %1405 = vdwg.mxu0
        %v1406 = vmul.f32 %v1346, 0.35355338
        %v1407 = vmul.f32 %v1365, 0.35355338
        %v1408 = vmul.f32 %v1384, 0.35355338
        %v1409 = vmul.f32 %v1403, 0.35355338
        %v1410 = vadd.f32 %v1406, %v951
        %v1411 = vadd.f32 %v1407, %v951
        %v1412 = vadd.f32 %v1408, %v951
        %v1413 = vadd.f32 %v1409, %v951
        %v1414 = vsel %vm1329, %v1410, -inf
        %1415 = vmax.xlane.f32.xlu0 %v1414
        %v1416 = vpop.xlane.xlu0 %1415
        %v1417 = vsel %vm1329, %v1411, -inf
        %1418 = vmax.xlane.f32.xlu0 %v1417
        %v1419 = vpop.xlane.xlu0 %1418
        %v1420 = vsel %vm1329, %v1412, -inf
        %1421 = vmax.xlane.f32.xlu0 %v1420
        %v1422 = vpop.xlane.xlu0 %1421
        %v1423 = vsel %vm1329, %v1413, -inf
        %1424 = vmax.xlane.f32.xlu0 %v1423
        %v1425 = vpop.xlane.xlu0 %1424
        %v1426 = vsub.f32 %v1410, %v1416
        %v1427 = vsub.f32 %v1411, %v1419
        %v1428 = vsub.f32 %v1412, %v1422
        %v1429 = vsub.f32 %v1413, %v1425
        %v1430 = vmul.f32 %v1426, 1.442695
        %v1431 = vpow.pop %v1430
        %v1432 = vmul.f32 %v1427, 1.442695
        %v1433 = vpow.pop %v1432
        %v1434 = vmul.f32 %v1428, 1.442695
        %v1435 = vpow.pop %v1434
        %v1436 = vmul.f32 %v1429, 1.442695
        %v1437 = vpow.pop %v1436
        %v1438 = vsel %vm1329, %v1431, 0.0
        %1439 = vadd.xlane.f32.xlu0 %v1438
        %v1440 = vpop.xlane.xlu0 %1439
        %v1441 = vsel %vm1329, %v1433, 0.0
        %1442 = vadd.xlane.f32.xlu0 %v1441
        %v1443 = vpop.xlane.xlu0 %1442
        %v1444 = vsel %vm1329, %v1435, 0.0
        %1445 = vadd.xlane.f32.xlu0 %v1444
        %v1446 = vpop.xlane.xlu0 %1445
        %v1447 = vsel %vm1329, %v1437, 0.0
        %1448 = vadd.xlane.f32.xlu0 %v1447
        %v1449 = vpop.xlane.xlu0 %1448
        %v1450 = vrcp.pop %v1440
        %v1451 = vrcp.pop %v1443
        %v1452 = vrcp.pop %v1446
        %v1453 = vrcp.pop %v1449
        %v1454 = vmul.f32 %v1431, %v1450
        %v1455 = vmul.f32 %v1433, %v1451
        %v1456 = vmul.f32 %v1435, %v1452
        %v1457 = vmul.f32 %v1437, %v1453
        %v1458 = vpack.c.bf16 %v1454, %v1454
        %v1459 = vpack.c.bf16 %v1455, %v1455
        %v1460 = vpack.c.bf16 %v1456, %v1456
        %v1461 = vpack.c.bf16 %v1457, %v1457
        %v1463 = vsel %vm1329, %v1458, 0
        %vm1465 = vcmask 1043456
        %v1467 = vsel %vm1465, %v1325, 0
        %1469 = vmatpush.bf16.msra.mxu0 0
        %1470 = vmatpush.bf16.msra.mxu0 0
        %1471 = vmatpush.bf16.msra.mxu0 0
        %1472 = vmatpush.bf16.msra.mxu0 0
        %1473 = vmatpush.bf16.msra.mxu0 0
        %1474 = vmatpush.bf16.msra.mxu0 0
        %1475 = vmatpush.bf16.msra.mxu0 0
        %1476 = vmatpush.bf16.msra.mxu0 %v1467
        %1477 = vmatmul.bf16.gmra.mxu0 %v1463
        %v1478 = vpop.f32.mrf.mxu0
        %v1479 = vadd.f32 0.0, %v1478
        %v1480 = vpop.f32.mrf.mxu0
        %1481 = vdwg.mxu0
        %v1483 = vsel %vm1329, %v1459, 0
        %v1486 = vsel %vm1465, %v1326, 0
        %1488 = vmatpush.bf16.msra.mxu0 0
        %1489 = vmatpush.bf16.msra.mxu0 0
        %1490 = vmatpush.bf16.msra.mxu0 0
        %1491 = vmatpush.bf16.msra.mxu0 0
        %1492 = vmatpush.bf16.msra.mxu0 0
        %1493 = vmatpush.bf16.msra.mxu0 0
        %1494 = vmatpush.bf16.msra.mxu0 0
        %1495 = vmatpush.bf16.msra.mxu0 %v1486
        %1496 = vmatmul.bf16.gmra.mxu0 %v1483
        %v1497 = vpop.f32.mrf.mxu0
        %v1498 = vadd.f32 0.0, %v1497
        %v1499 = vpop.f32.mrf.mxu0
        %1500 = vdwg.mxu0
        %v1502 = vsel %vm1329, %v1460, 0
        %v1505 = vsel %vm1465, %v1327, 0
        %1507 = vmatpush.bf16.msra.mxu0 0
        %1508 = vmatpush.bf16.msra.mxu0 0
        %1509 = vmatpush.bf16.msra.mxu0 0
        %1510 = vmatpush.bf16.msra.mxu0 0
        %1511 = vmatpush.bf16.msra.mxu0 0
        %1512 = vmatpush.bf16.msra.mxu0 0
        %1513 = vmatpush.bf16.msra.mxu0 0
        %1514 = vmatpush.bf16.msra.mxu0 %v1505
        %1515 = vmatmul.bf16.gmra.mxu0 %v1502
        %v1516 = vpop.f32.mrf.mxu0
        %v1517 = vadd.f32 0.0, %v1516
        %v1518 = vpop.f32.mrf.mxu0
        %1519 = vdwg.mxu0
        %v1521 = vsel %vm1329, %v1461, 0
        %v1524 = vsel %vm1465, %v1328, 0
        %1526 = vmatpush.bf16.msra.mxu0 0
        %1527 = vmatpush.bf16.msra.mxu0 0
        %1528 = vmatpush.bf16.msra.mxu0 0
        %1529 = vmatpush.bf16.msra.mxu0 0
        %1530 = vmatpush.bf16.msra.mxu0 0
        %1531 = vmatpush.bf16.msra.mxu0 0
        %1532 = vmatpush.bf16.msra.mxu0 0
        %1533 = vmatpush.bf16.msra.mxu0 %v1524
        %1534 = vmatmul.bf16.gmra.mxu0 %v1521
        %v1535 = vpop.f32.mrf.mxu0
        %v1536 = vadd.f32 0.0, %v1535
        %v1537 = vpop.f32.mrf.mxu0
        %1538 = vdwg.mxu0
        %v1539 = vrot.slane %v1517, 4
        %v1540 = vsel %vm963, %v1539, %v1479
        %v1541 = vrot.slane %v1479, 4
        %v1542 = vsel %vm963, %v1517, %v1541
        %v1544 = vunpack.c.l.s4 1983009808
        %v1545 = vunpack.c.0.s8 %v1544
        %v1546 = vperm.slane %v1540, %v1545
        %v1548 = vunpack.c.l.s4 1983009808
        %v1549 = vunpack.c.0.s8 %v1548
        %v1550 = vperm.slane %v1542, %v1549
        %v1551 = vrot.slane %v1536, 4
        %v1552 = vsel %vm963, %v1551, %v1498
        %v1553 = vrot.slane %v1498, 4
        %v1554 = vsel %vm963, %v1536, %v1553
        %v1556 = vunpack.c.l.s4 1983009808
        %v1557 = vunpack.c.0.s8 %v1556
        %v1558 = vperm.slane %v1552, %v1557
        %v1560 = vunpack.c.l.s4 1983009808
        %v1561 = vunpack.c.0.s8 %v1560
        %v1562 = vperm.slane %v1554, %v1561
        %v1563 = vrot.slane %v1558, 4
        %v1564 = vsel %vm963, %v1563, %v1546
        %v1565 = vrot.slane %v1546, 4
        %v1566 = vsel %vm963, %v1558, %v1565
        %v1568 = vunpack.c.l.s4 1934713408
        %v1569 = vunpack.c.0.s8 %v1568
        %v1570 = vperm.slane %v1564, %v1569
        %v1572 = vunpack.c.l.s4 1934713408
        %v1573 = vunpack.c.0.s8 %v1572
        %v1574 = vperm.slane %v1566, %v1573
        %v1575 = vrot.slane %v1562, 4
        %v1576 = vsel %vm963, %v1575, %v1550
        %v1577 = vrot.slane %v1550, 4
        %v1578 = vsel %vm963, %v1562, %v1577
        %v1580 = vunpack.c.l.s4 1934713408
        %v1581 = vunpack.c.0.s8 %v1580
        %v1582 = vperm.slane %v1576, %v1581
        %v1584 = vunpack.c.l.s4 1934713408
        %v1585 = vunpack.c.0.s8 %v1584
        %v1586 = vperm.slane %v1578, %v1585
        %v1587 = vrot.slane %v1570, 4
        %v1588 = vsel %vm963, 0.0, %v1587
        %v1589 = vrot.slane %v1574, 4
        %v1590 = vsel %vm963, 0.0, %v1589
        %v1591 = vrot.slane %v1582, 4
        %v1592 = vsel %vm963, 0.0, %v1591
        %v1593 = vrot.slane %v1586, 4
        %v1594 = vsel %vm963, 0.0, %v1593
        %v1595 = vsel %vm963, %v1589, %v1570
        %v1597 = vunpack.c.l.s4 1983009808
        %v1598 = vunpack.c.0.s8 %v1597
        %v1599 = vperm.slane %v1595, %v1598
        %v1600 = vrot.slane %v1590, 4
        %v1601 = vsel %vm963, %v1600, %v1588
        %v1603 = vunpack.c.l.s4 1983009808
        %v1604 = vunpack.c.0.s8 %v1603
        %v1605 = vperm.slane %v1601, %v1604
        %v1606 = vsel %vm963, %v1593, %v1582
        %v1608 = vunpack.c.l.s4 1983009808
        %v1609 = vunpack.c.0.s8 %v1608
        %v1610 = vperm.slane %v1606, %v1609
        %v1611 = vrot.slane %v1594, 4
        %v1612 = vsel %vm963, %v1611, %v1592
        %v1614 = vunpack.c.l.s4 1983009808
        %v1615 = vunpack.c.0.s8 %v1614
        %v1616 = vperm.slane %v1612, %v1615
        %v1617 = vrot.slane %v1605, 4
        %v1618 = vsel %vm963, %v1617, %v1599
        %v1619 = vrot.slane %v1599, 4
        %v1620 = vsel %vm963, %v1605, %v1619
        %v1622 = vunpack.c.l.s4 1934713408
        %v1623 = vunpack.c.0.s8 %v1622
        %v1624 = vperm.slane %v1618, %v1623
        %v1626 = vunpack.c.l.s4 1934713408
        %v1627 = vunpack.c.0.s8 %v1626
        %v1628 = vperm.slane %v1620, %v1627
        %v1629 = vrot.slane %v1616, 4
        %v1630 = vsel %vm963, %v1629, %v1610
        %v1631 = vrot.slane %v1610, 4
        %v1632 = vsel %vm963, %v1616, %v1631
        %v1634 = vunpack.c.l.s4 1934713408
        %v1635 = vunpack.c.0.s8 %v1634
        %v1636 = vperm.slane %v1630, %v1635
        %v1638 = vunpack.c.l.s4 1934713408
        %v1639 = vunpack.c.0.s8 %v1638
        %v1640 = vperm.slane %v1632, %v1639
        %v1641 = vrot.slane %v1636, 4
        %v1642 = vsel %vm963, %v1641, %v1624
        %v1643 = vrot.slane %v1624, 4
        %v1644 = vsel %vm963, %v1636, %v1643
        %v1645 = vrot.slane %v1640, 4
        %v1646 = vsel %vm963, %v1645, %v1628
        %v1647 = vrot.slane %v1628, 4
        %v1648 = vsel %vm963, %v1640, %v1647
        %1650 = vrot.lane.b32.xlu0 %v1644, 8
        %v1651 = vpop.permute.xlu0 %1650
        %1654 = vrot.lane.b32.xlu0 %v1646, 16
        %v1655 = vpop.permute.xlu0 %1654
        %1658 = vrot.lane.b32.xlu0 %v1648, 24
        %v1659 = vpop.permute.xlu0 %1658
        %v1661 = vsel %vm1329, %v1642, %v1651
        %vm1662 = vcmask 130048
        %v1663 = vsel %vm1662, %v1661, %v1655
        %vm1664 = vcmask 195584
        %v1665 = vsel %vm1664, %v1663, %v1659
        %v1666 = vpack.c.bf16 %v1665, %v1665
        %v1667 = vld [vmem:[#allocation10] sm:$0xf]
        %v1668 = vld [vmem:[#allocation10 + $0x4] sm:$0xf]
        %v1669 = vld [vmem:[#allocation10 + $0x8] sm:$0xf]
        %v1670 = vld [vmem:[#allocation10 + $0xc] sm:$0xf]
        %v1671 = vld [vmem:[#allocation11] sm:$0x1]
        %v1673 = vperm.slane %v1671, 0
        %v1679 = vunpack.c.l.b16 %v1667
        %v1680 = vunpack.c.l.b16 %v1668
        %v1681 = vunpack.c.l.b16 %v1669
        %v1682 = vunpack.c.l.b16 %v1670
        %v1683 = vpack.c.b16 %v1680, %v1679
        %v1684 = vpack.c.b16 %v1682, %v1681
        %v1688 = vsel %vm876, %v1666, 0
        %1690 = vmatpush.bf16.msra.mxu0 0
        %1691 = vmatpush.bf16.msra.mxu0 0
        %1692 = vmatpush.bf16.msra.mxu0 0
        %1693 = vmatpush.bf16.msra.mxu0 0
        %1694 = vmatpush.bf16.msra.mxu0 0
        %1695 = vmatpush.bf16.msra.mxu0 0
        %1696 = vmatpush.bf16.msra.mxu0 %v1684
        %1697 = vmatpush.bf16.msra.mxu0 %v1683
        %1698 = vmatmul.bf16.gmra.mxu0 %v1688
        %v1699 = vpop.f32.mrf.mxu0
        %v1700 = vadd.f32 %v1673, %v1699
        %v1701 = vpop.f32.mrf.mxu0
        %1702 = vdwg.mxu0
        %v1703 = vadd.f32 %v873, %v1700
        %v1704 = vld [vmem:[#allocation5 + $0x2] sm:$0x1]
        %v1705 = vld [vmem:[#allocation5 + $0x3] sm:$0x1]
        %v1706 = vsel %vm876, %v1703, 0.0
        %1707 = vadd.xlane.f32.xlu0 %v1706
        %v1708 = vpop.xlane.xlu0 %1707
        %v1709 = vmul.f32 %v1708, %v886
        %v1710 = vmul.f32 %v1703, %v1703
        %v1711 = vsel %vm876, %v1710, 0.0
        %1712 = vadd.xlane.f32.xlu0 %v1711
        %v1713 = vpop.xlane.xlu0 %1712
        %v1714 = vmul.f32 %v1713, %v886
        %v1715 = vmul.f32 %v1709, %v1709
        %v1716 = vsub.f32 %v1714, %v1715
        %v1717 = vsub.f32 %v1703, %v1709
        %v1718 = vadd.f32 %v1716, 1e-05
        %v1719 = vrsqrt.pop %v1718
        %v1720 = vmul.f32 %v1719, %v1718
        %v1721 = vmul.f32 %v1720, %v1719
        %v1722 = vmul.f32 0.5, %v1721
        %v1723 = vsub.f32 1.5, %v1722
        %v1724 = vmul.f32 %v1719, %v1723
        %vm1725 = vweird.f32 %v1718
        %vm1726 = vweird.f32 %v1719
        %vm1727 = vmor %vm1725, %vm1726
        %v1728 = vsel %vm1727, %v1719, %v1724
        %v1729 = vmul.f32 %v1717, %v1728
        %v1730 = vperm.slane %v1704, 0
        %v1731 = vmul.f32 %v1729, %v1730
        %v1732 = vperm.slane %v1705, 0
        %v1733 = vadd.f32 %v1731, %v1732
        %v1734 = vpack.c.bf16 %v1733, %v1733
        %v1735 = vld [vmem:[#allocation13] sm:$0xf]
        %v1736 = vld [vmem:[#allocation13 + $0x4] sm:$0xf]
        %v1737 = vld [vmem:[#allocation13 + $0x8] sm:$0xf]
        %v1738 = vld [vmem:[#allocation13 + $0xc] sm:$0xf]
        %v1739 = vld [vmem:[#allocation14] sm:$0x1]
        %v1741 = vperm.slane %v1739, 0
        %v1747 = vunpack.c.l.b16 %v1735
        %v1748 = vunpack.c.l.b16 %v1736
        %v1749 = vunpack.c.l.b16 %v1737
        %v1750 = vunpack.c.l.b16 %v1738
        %v1751 = vpack.c.b16 %v1748, %v1747
        %v1752 = vpack.c.b16 %v1750, %v1749
        %v1756 = vsel %vm876, %v1734, 0
        %1758 = vmatpush.bf16.msra.mxu0 0
        %1759 = vmatpush.bf16.msra.mxu0 0
        %1760 = vmatpush.bf16.msra.mxu0 0
        %1761 = vmatpush.bf16.msra.mxu0 0
        %1762 = vmatpush.bf16.msra.mxu0 0
        %1763 = vmatpush.bf16.msra.mxu0 0
        %1764 = vmatpush.bf16.msra.mxu0 %v1752
        %1765 = vmatpush.bf16.msra.mxu0 %v1751
        %1766 = vmatmul.bf16.gmra.mxu0 %v1756
        %v1767 = vpop.f32.mrf.mxu0
        %v1768 = vadd.f32 %v1741, %v1767
        %v1769 = vpop.f32.mrf.mxu0
        %1770 = vdwg.mxu0
        %v1771 = vld [vmem:[%s867] sm:$0xff]
        %v1772 = vpack.c.bf16 %v1771, %v1771
        %v1773 = vld [vmem:[#allocation16] sm:$0xf]
        %v1774 = vld [vmem:[#allocation16 + $0x4] sm:$0xf]
        %v1775 = vld [vmem:[#allocation16 + $0x8] sm:$0xf]
        %v1776 = vld [vmem:[#allocation16 + $0xc] sm:$0xf]
        %v1777 = vld [vmem:[#allocation17] sm:$0x1]
        %v1779 = vperm.slane %v1777, 0
        %v1785 = vunpack.c.l.b16 %v1773
        %v1786 = vunpack.c.l.b16 %v1774
        %v1787 = vunpack.c.l.b16 %v1775
        %v1788 = vunpack.c.l.b16 %v1776
        %v1789 = vpack.c.b16 %v1786, %v1785
        %v1790 = vpack.c.b16 %v1788, %v1787
        %v1794 = vsel %vm876, %v1772, 0
        %1796 = vmatpush.bf16.msra.mxu0 0
        %1797 = vmatpush.bf16.msra.mxu0 0
        %1798 = vmatpush.bf16.msra.mxu0 0
        %1799 = vmatpush.bf16.msra.mxu0 0
        %1800 = vmatpush.bf16.msra.mxu0 0
        %1801 = vmatpush.bf16.msra.mxu0 0
        %1802 = vmatpush.bf16.msra.mxu0 %v1790
        %1803 = vmatpush.bf16.msra.mxu0 %v1789
        %1804 = vmatmul.bf16.gmra.mxu0 %v1794
        %v1805 = vpop.f32.mrf.mxu0
        %v1806 = vadd.f32 %v1779, %v1805
        %v1807 = vpop.f32.mrf.mxu0
        %1808 = vdwg.mxu0
        %v1809 = vld [vmem:[%s727] sm:$0xff]
        %v1810 = vsub.f32 %v1809, 1.0
        %v1811 = vmul.f32 %v1810, 1e+09
        %1813 = vrot.lane.b32.xlu0 %v1768, 120
        %v1814 = vpop.permute.xlu0 %1813
        %1816 = vrot.lane.b32.xlu0 %v1768, 112
        %v1817 = vpop.permute.xlu0 %1816
        %1819 = vrot.lane.b32.xlu0 %v1768, 104
        %v1820 = vpop.permute.xlu0 %1819
        %v1822 = vrot.slane %v1817, 4
        %v1823 = vsel %vm963, %v1822, %v1768
        %v1824 = vrot.slane %v1768, 4
        %v1825 = vsel %vm963, %v1817, %v1824
        %v1827 = vunpack.c.l.s4 1983009808
        %v1828 = vunpack.c.0.s8 %v1827
        %v1829 = vperm.slane %v1823, %v1828
        %v1831 = vunpack.c.l.s4 1983009808
        %v1832 = vunpack.c.0.s8 %v1831
        %v1833 = vperm.slane %v1825, %v1832
        %v1834 = vrot.slane %v1820, 4
        %v1835 = vsel %vm963, %v1834, %v1814
        %v1836 = vrot.slane %v1814, 4
        %v1837 = vsel %vm963, %v1820, %v1836
        %v1839 = vunpack.c.l.s4 1983009808
        %v1840 = vunpack.c.0.s8 %v1839
        %v1841 = vperm.slane %v1835, %v1840
        %v1843 = vunpack.c.l.s4 1983009808
        %v1844 = vunpack.c.0.s8 %v1843
        %v1845 = vperm.slane %v1837, %v1844
        %v1846 = vrot.slane %v1841, 4
        %v1847 = vsel %vm963, %v1846, %v1829
        %v1848 = vrot.slane %v1829, 4
        %v1849 = vsel %vm963, %v1841, %v1848
        %v1851 = vunpack.c.l.s4 1934713408
        %v1852 = vunpack.c.0.s8 %v1851
        %v1853 = vperm.slane %v1847, %v1852
        %v1855 = vunpack.c.l.s4 1934713408
        %v1856 = vunpack.c.0.s8 %v1855
        %v1857 = vperm.slane %v1849, %v1856
        %v1858 = vrot.slane %v1845, 4
        %v1859 = vsel %vm963, %v1858, %v1833
        %v1860 = vrot.slane %v1833, 4
        %v1861 = vsel %vm963, %v1845, %v1860
        %v1863 = vunpack.c.l.s4 1934713408
        %v1864 = vunpack.c.0.s8 %v1863
        %v1865 = vperm.slane %v1859, %v1864
        %v1867 = vunpack.c.l.s4 1934713408
        %v1868 = vunpack.c.0.s8 %v1867
        %v1869 = vperm.slane %v1861, %v1868
        %v1870 = vrot.slane %v1853, 4
        %v1871 = vsel %vm963, 0.0, %v1870
        %v1872 = vrot.slane %v1857, 4
        %v1873 = vsel %vm963, 0.0, %v1872
        %v1874 = vrot.slane %v1865, 4
        %v1875 = vsel %vm963, 0.0, %v1874
        %v1876 = vrot.slane %v1869, 4
        %v1877 = vsel %vm963, 0.0, %v1876
        %v1878 = vsel %vm963, %v1872, %v1853
        %v1880 = vunpack.c.l.s4 1983009808
        %v1881 = vunpack.c.0.s8 %v1880
        %v1882 = vperm.slane %v1878, %v1881
        %v1883 = vrot.slane %v1873, 4
        %v1884 = vsel %vm963, %v1883, %v1871
        %v1886 = vunpack.c.l.s4 1983009808
        %v1887 = vunpack.c.0.s8 %v1886
        %v1888 = vperm.slane %v1884, %v1887
        %v1889 = vsel %vm963, %v1876, %v1865
        %v1891 = vunpack.c.l.s4 1983009808
        %v1892 = vunpack.c.0.s8 %v1891
        %v1893 = vperm.slane %v1889, %v1892
        %v1894 = vrot.slane %v1877, 4
        %v1895 = vsel %vm963, %v1894, %v1875
        %v1897 = vunpack.c.l.s4 1983009808
        %v1898 = vunpack.c.0.s8 %v1897
        %v1899 = vperm.slane %v1895, %v1898
        %v1900 = vrot.slane %v1888, 4
        %v1901 = vsel %vm963, %v1900, %v1882
        %v1902 = vrot.slane %v1882, 4
        %v1903 = vsel %vm963, %v1888, %v1902
        %v1905 = vunpack.c.l.s4 1934713408
        %v1906 = vunpack.c.0.s8 %v1905
        %v1907 = vperm.slane %v1901, %v1906
        %v1909 = vunpack.c.l.s4 1934713408
        %v1910 = vunpack.c.0.s8 %v1909
        %v1911 = vperm.slane %v1903, %v1910
        %v1912 = vrot.slane %v1899, 4
        %v1913 = vsel %vm963, %v1912, %v1893
        %v1914 = vrot.slane %v1893, 4
        %v1915 = vsel %vm963, %v1899, %v1914
        %v1917 = vunpack.c.l.s4 1934713408
        %v1918 = vunpack.c.0.s8 %v1917
        %v1919 = vperm.slane %v1913, %v1918
        %v1921 = vunpack.c.l.s4 1934713408
        %v1922 = vunpack.c.0.s8 %v1921
        %v1923 = vperm.slane %v1915, %v1922
        %v1924 = vrot.slane %v1919, 4
        %v1925 = vsel %vm963, %v1924, %v1907
        %v1926 = vrot.slane %v1907, 4
        %v1927 = vsel %vm963, %v1919, %v1926
        %v1928 = vrot.slane %v1923, 4
        %v1929 = vsel %vm963, %v1928, %v1911
        %v1930 = vrot.slane %v1911, 4
        %v1931 = vsel %vm963, %v1923, %v1930
        %v1932 = vpack.c.bf16 %v1925, %v1925
        %v1933 = vpack.c.bf16 %v1927, %v1927
        %v1934 = vpack.c.bf16 %v1929, %v1929
        %v1935 = vpack.c.bf16 %v1931, %v1931
        %1937 = vrot.lane.b32.xlu0 %v1806, 120
        %v1938 = vpop.permute.xlu0 %1937
        %1940 = vrot.lane.b32.xlu0 %v1806, 112
        %v1941 = vpop.permute.xlu0 %1940
        %1943 = vrot.lane.b32.xlu0 %v1806, 104
        %v1944 = vpop.permute.xlu0 %1943
        %v1946 = vrot.slane %v1941, 4
        %v1947 = vsel %vm963, %v1946, %v1806
        %v1948 = vrot.slane %v1806, 4
        %v1949 = vsel %vm963, %v1941, %v1948
        %v1951 = vunpack.c.l.s4 1983009808
        %v1952 = vunpack.c.0.s8 %v1951
        %v1953 = vperm.slane %v1947, %v1952
        %v1955 = vunpack.c.l.s4 1983009808
        %v1956 = vunpack.c.0.s8 %v1955
        %v1957 = vperm.slane %v1949, %v1956
        %v1958 = vrot.slane %v1944, 4
        %v1959 = vsel %vm963, %v1958, %v1938
        %v1960 = vrot.slane %v1938, 4
        %v1961 = vsel %vm963, %v1944, %v1960
        %v1963 = vunpack.c.l.s4 1983009808
        %v1964 = vunpack.c.0.s8 %v1963
        %v1965 = vperm.slane %v1959, %v1964
        %v1967 = vunpack.c.l.s4 1983009808
        %v1968 = vunpack.c.0.s8 %v1967
        %v1969 = vperm.slane %v1961, %v1968
        %v1970 = vrot.slane %v1965, 4
        %v1971 = vsel %vm963, %v1970, %v1953
        %v1972 = vrot.slane %v1953, 4
        %v1973 = vsel %vm963, %v1965, %v1972
        %v1975 = vunpack.c.l.s4 1934713408
        %v1976 = vunpack.c.0.s8 %v1975
        %v1977 = vperm.slane %v1971, %v1976
        %v1979 = vunpack.c.l.s4 1934713408
        %v1980 = vunpack.c.0.s8 %v1979
        %v1981 = vperm.slane %v1973, %v1980
        %v1982 = vrot.slane %v1969, 4
        %v1983 = vsel %vm963, %v1982, %v1957
        %v1984 = vrot.slane %v1957, 4
        %v1985 = vsel %vm963, %v1969, %v1984
        %v1987 = vunpack.c.l.s4 1934713408
        %v1988 = vunpack.c.0.s8 %v1987
        %v1989 = vperm.slane %v1983, %v1988
        %v1991 = vunpack.c.l.s4 1934713408
        %v1992 = vunpack.c.0.s8 %v1991
        %v1993 = vperm.slane %v1985, %v1992
        %v1994 = vrot.slane %v1977, 4
        %v1995 = vsel %vm963, 0.0, %v1994
        %v1996 = vrot.slane %v1981, 4
        %v1997 = vsel %vm963, 0.0, %v1996
        %v1998 = vrot.slane %v1989, 4
        %v1999 = vsel %vm963, 0.0, %v1998
        %v2000 = vrot.slane %v1993, 4
        %v2001 = vsel %vm963, 0.0, %v2000
        %v2002 = vsel %vm963, %v1996, %v1977
        %v2004 = vunpack.c.l.s4 1983009808
        %v2005 = vunpack.c.0.s8 %v2004
        %v2006 = vperm.slane %v2002, %v2005
        %v2007 = vrot.slane %v1997, 4
        %v2008 = vsel %vm963, %v2007, %v1995
        %v2010 = vunpack.c.l.s4 1983009808
        %v2011 = vunpack.c.0.s8 %v2010
        %v2012 = vperm.slane %v2008, %v2011
        %v2013 = vsel %vm963, %v2000, %v1989
        %v2015 = vunpack.c.l.s4 1983009808
        %v2016 = vunpack.c.0.s8 %v2015
        %v2017 = vperm.slane %v2013, %v2016
        %v2018 = vrot.slane %v2001, 4
        %v2019 = vsel %vm963, %v2018, %v1999
        %v2021 = vunpack.c.l.s4 1983009808
        %v2022 = vunpack.c.0.s8 %v2021
        %v2023 = vperm.slane %v2019, %v2022
        %v2024 = vrot.slane %v2012, 4
        %v2025 = vsel %vm963, %v2024, %v2006
        %v2026 = vrot.slane %v2006, 4
        %v2027 = vsel %vm963, %v2012, %v2026
        %v2029 = vunpack.c.l.s4 1934713408
        %v2030 = vunpack.c.0.s8 %v2029
        %v2031 = vperm.slane %v2025, %v2030
        %v2033 = vunpack.c.l.s4 1934713408
        %v2034 = vunpack.c.0.s8 %v2033
        %v2035 = vperm.slane %v2027, %v2034
        %v2036 = vrot.slane %v2023, 4
        %v2037 = vsel %vm963, %v2036, %v2017
        %v2038 = vrot.slane %v2017, 4
        %v2039 = vsel %vm963, %v2023, %v2038
        %v2041 = vunpack.c.l.s4 1934713408
        %v2042 = vunpack.c.0.s8 %v2041
        %v2043 = vperm.slane %v2037, %v2042
        %v2045 = vunpack.c.l.s4 1934713408
        %v2046 = vunpack.c.0.s8 %v2045
        %v2047 = vperm.slane %v2039, %v2046
        %v2048 = vrot.slane %v2043, 4
        %v2049 = vsel %vm963, %v2048, %v2031
        %v2050 = vrot.slane %v2031, 4
        %v2051 = vsel %vm963, %v2043, %v2050
        %v2052 = vrot.slane %v2047, 4
        %v2053 = vsel %vm963, %v2052, %v2035
        %v2054 = vrot.slane %v2035, 4
        %v2055 = vsel %vm963, %v2047, %v2054
        %v2056 = vpack.c.bf16 %v2049, %v2049
        %v2057 = vpack.c.bf16 %v2051, %v2051
        %v2058 = vpack.c.bf16 %v2053, %v2053
        %v2059 = vpack.c.bf16 %v2055, %v2055
        %2060 = vrot.lane.b32.xlu0 %v1806, 96
        %v2061 = vpop.permute.xlu0 %2060
        %2062 = vrot.lane.b32.xlu0 %v1938, 96
        %v2063 = vpop.permute.xlu0 %2062
        %2064 = vrot.lane.b32.xlu0 %v1941, 96
        %v2065 = vpop.permute.xlu0 %2064
        %2066 = vrot.lane.b32.xlu0 %v1944, 96
        %v2067 = vpop.permute.xlu0 %2066
        %v2072 = vrot.slane %v2065, 4
        %v2073 = vsel %vm963, %v2072, %v2061
        %v2074 = vrot.slane %v2061, 4
        %v2075 = vsel %vm963, %v2065, %v2074
        %v2077 = vunpack.c.l.s4 1983009808
        %v2078 = vunpack.c.0.s8 %v2077
        %v2079 = vperm.slane %v2073, %v2078
        %v2081 = vunpack.c.l.s4 1983009808
        %v2082 = vunpack.c.0.s8 %v2081
        %v2083 = vperm.slane %v2075, %v2082
        %v2084 = vrot.slane %v2067, 4
        %v2085 = vsel %vm963, %v2084, %v2063
        %v2086 = vrot.slane %v2063, 4
        %v2087 = vsel %vm963, %v2067, %v2086
        %v2089 = vunpack.c.l.s4 1983009808
        %v2090 = vunpack.c.0.s8 %v2089
        %v2091 = vperm.slane %v2085, %v2090
        %v2093 = vunpack.c.l.s4 1983009808
        %v2094 = vunpack.c.0.s8 %v2093
        %v2095 = vperm.slane %v2087, %v2094
        %v2096 = vrot.slane %v2091, 4
        %v2097 = vsel %vm963, %v2096, %v2079
        %v2098 = vrot.slane %v2079, 4
        %v2099 = vsel %vm963, %v2091, %v2098
        %v2101 = vunpack.c.l.s4 1934713408
        %v2102 = vunpack.c.0.s8 %v2101
        %v2103 = vperm.slane %v2097, %v2102
        %v2105 = vunpack.c.l.s4 1934713408
        %v2106 = vunpack.c.0.s8 %v2105
        %v2107 = vperm.slane %v2099, %v2106
        %v2108 = vrot.slane %v2095, 4
        %v2109 = vsel %vm963, %v2108, %v2083
        %v2110 = vrot.slane %v2083, 4
        %v2111 = vsel %vm963, %v2095, %v2110
        %v2113 = vunpack.c.l.s4 1934713408
        %v2114 = vunpack.c.0.s8 %v2113
        %v2115 = vperm.slane %v2109, %v2114
        %v2117 = vunpack.c.l.s4 1934713408
        %v2118 = vunpack.c.0.s8 %v2117
        %v2119 = vperm.slane %v2111, %v2118
        %v2120 = vrot.slane %v2103, 4
        %v2121 = vsel %vm963, 0.0, %v2120
        %v2122 = vrot.slane %v2107, 4
        %v2123 = vsel %vm963, 0.0, %v2122
        %v2124 = vrot.slane %v2115, 4
        %v2125 = vsel %vm963, 0.0, %v2124
        %v2126 = vrot.slane %v2119, 4
        %v2127 = vsel %vm963, 0.0, %v2126
        %v2128 = vsel %vm963, %v2122, %v2103
        %v2130 = vunpack.c.l.s4 1983009808
        %v2131 = vunpack.c.0.s8 %v2130
        %v2132 = vperm.slane %v2128, %v2131
        %v2133 = vrot.slane %v2123, 4
        %v2134 = vsel %vm963, %v2133, %v2121
        %v2136 = vunpack.c.l.s4 1983009808
        %v2137 = vunpack.c.0.s8 %v2136
        %v2138 = vperm.slane %v2134, %v2137
        %v2139 = vsel %vm963, %v2126, %v2115
        %v2141 = vunpack.c.l.s4 1983009808
        %v2142 = vunpack.c.0.s8 %v2141
        %v2143 = vperm.slane %v2139, %v2142
        %v2144 = vrot.slane %v2127, 4
        %v2145 = vsel %vm963, %v2144, %v2125
        %v2147 = vunpack.c.l.s4 1983009808
        %v2148 = vunpack.c.0.s8 %v2147
        %v2149 = vperm.slane %v2145, %v2148
        %v2150 = vrot.slane %v2138, 4
        %v2151 = vsel %vm963, %v2150, %v2132
        %v2152 = vrot.slane %v2132, 4
        %v2153 = vsel %vm963, %v2138, %v2152
        %v2155 = vunpack.c.l.s4 1934713408
        %v2156 = vunpack.c.0.s8 %v2155
        %v2157 = vperm.slane %v2151, %v2156
        %v2159 = vunpack.c.l.s4 1934713408
        %v2160 = vunpack.c.0.s8 %v2159
        %v2161 = vperm.slane %v2153, %v2160
        %v2162 = vrot.slane %v2149, 4
        %v2163 = vsel %vm963, %v2162, %v2143
        %v2164 = vrot.slane %v2143, 4
        %v2165 = vsel %vm963, %v2149, %v2164
        %v2167 = vunpack.c.l.s4 1934713408
        %v2168 = vunpack.c.0.s8 %v2167
        %v2169 = vperm.slane %v2163, %v2168
        %v2171 = vunpack.c.l.s4 1934713408
        %v2172 = vunpack.c.0.s8 %v2171
        %v2173 = vperm.slane %v2165, %v2172
        %v2174 = vrot.slane %v2169, 4
        %v2175 = vsel %vm963, %v2174, %v2157
        %v2176 = vrot.slane %v2157, 4
        %v2177 = vsel %vm963, %v2169, %v2176
        %v2178 = vrot.slane %v2173, 4
        %v2179 = vsel %vm963, %v2178, %v2161
        %v2180 = vrot.slane %v2161, 4
        %v2181 = vsel %vm963, %v2173, %v2180
        %v2182 = vpack.c.bf16 %v2175, %v2175
        %v2183 = vpack.c.bf16 %v2177, %v2177
        %v2184 = vpack.c.bf16 %v2179, %v2179
        %v2185 = vpack.c.bf16 %v2181, %v2181
        %v2187 = vsel %vm1329, %v1932, 0
        %v2190 = vsel %vm1329, %v2056, 0
        %2192 = vmatpush.bf16.xpose.msra.mxu0 0
        %2193 = vmatpush.bf16.xpose.msra.mxu0 0
        %2194 = vmatpush.bf16.xpose.msra.mxu0 0
        %2195 = vmatpush.bf16.xpose.msra.mxu0 0
        %2196 = vmatpush.bf16.xpose.msra.mxu0 0
        %2197 = vmatpush.bf16.xpose.msra.mxu0 0
        %2198 = vmatpush.bf16.xpose.msra.mxu0 0
        %2199 = vmatpush.bf16.xpose.msra.mxu0 %v2190
        %2200 = vmatmul.bf16.gmra.mxu0 %v2187
        %v2201 = vpop.f32.mrf.mxu0
        %v2202 = vadd.f32 0.0, %v2201
        %v2203 = vpop.f32.mrf.mxu0
        %2204 = vdwg.mxu0
        %v2206 = vsel %vm1329, %v1933, 0
        %v2209 = vsel %vm1329, %v2057, 0
        %2211 = vmatpush.bf16.xpose.msra.mxu0 0
        %2212 = vmatpush.bf16.xpose.msra.mxu0 0
        %2213 = vmatpush.bf16.xpose.msra.mxu0 0
        %2214 = vmatpush.bf16.xpose.msra.mxu0 0
        %2215 = vmatpush.bf16.xpose.msra.mxu0 0
        %2216 = vmatpush.bf16.xpose.msra.mxu0 0
        %2217 = vmatpush.bf16.xpose.msra.mxu0 0
        %2218 = vmatpush.bf16.xpose.msra.mxu0 %v2209
        %2219 = vmatmul.bf16.gmra.mxu0 %v2206
        %v2220 = vpop.f32.mrf.mxu0
        %v2221 = vadd.f32 0.0, %v2220
        %v2222 = vpop.f32.mrf.mxu0
        %2223 = vdwg.mxu0
        %v2225 = vsel %vm1329, %v1934, 0
        %v2228 = vsel %vm1329, %v2058, 0
        %2230 = vmatpush.bf16.xpose.msra.mxu0 0
        %2231 = vmatpush.bf16.xpose.msra.mxu0 0
        %2232 = vmatpush.bf16.xpose.msra.mxu0 0
        %2233 = vmatpush.bf16.xpose.msra.mxu0 0
        %2234 = vmatpush.bf16.xpose.msra.mxu0 0
        %2235 = vmatpush.bf16.xpose.msra.mxu0 0
        %2236 = vmatpush.bf16.xpose.msra.mxu0 0
        %2237 = vmatpush.bf16.xpose.msra.mxu0 %v2228
        %2238 = vmatmul.bf16.gmra.mxu0 %v2225
        %v2239 = vpop.f32.mrf.mxu0
        %v2240 = vadd.f32 0.0, %v2239
        %v2241 = vpop.f32.mrf.mxu0
        %2242 = vdwg.mxu0
        %v2244 = vsel %vm1329, %v1935, 0
        %v2247 = vsel %vm1329, %v2059, 0
        %2249 = vmatpush.bf16.xpose.msra.mxu0 0
        %2250 = vmatpush.bf16.xpose.msra.mxu0 0
        %2251 = vmatpush.bf16.xpose.msra.mxu0 0
        %2252 = vmatpush.bf16.xpose.msra.mxu0 0
        %2253 = vmatpush.bf16.xpose.msra.mxu0 0
        %2254 = vmatpush.bf16.xpose.msra.mxu0 0
        %2255 = vmatpush.bf16.xpose.msra.mxu0 0
        %2256 = vmatpush.bf16.xpose.msra.mxu0 %v2247
        %2257 = vmatmul.bf16.gmra.mxu0 %v2244
        %v2258 = vpop.f32.mrf.mxu0
        %v2259 = vadd.f32 0.0, %v2258
        %v2260 = vpop.f32.mrf.mxu0
        %2261 = vdwg.mxu0
        %v2262 = vmul.f32 %v2202, 0.35355338
        %v2263 = vmul.f32 %v2221, 0.35355338
        %v2264 = vmul.f32 %v2240, 0.35355338
        %v2265 = vmul.f32 %v2259, 0.35355338
        %v2266 = vadd.f32 %v2262, %v1811
        %v2267 = vadd.f32 %v2263, %v1811
        %v2268 = vadd.f32 %v2264, %v1811
        %v2269 = vadd.f32 %v2265, %v1811
        %v2270 = vsel %vm1329, %v2266, -inf
        %2271 = vmax.xlane.f32.xlu0 %v2270
        %v2272 = vpop.xlane.xlu0 %2271
        %v2273 = vsel %vm1329, %v2267, -inf
        %2274 = vmax.xlane.f32.xlu0 %v2273
        %v2275 = vpop.xlane.xlu0 %2274
        %v2276 = vsel %vm1329, %v2268, -inf
        %2277 = vmax.xlane.f32.xlu0 %v2276
        %v2278 = vpop.xlane.xlu0 %2277
        %v2279 = vsel %vm1329, %v2269, -inf
        %2280 = vmax.xlane.f32.xlu0 %v2279
        %v2281 = vpop.xlane.xlu0 %2280
        %v2282 = vsub.f32 %v2266, %v2272
        %v2283 = vsub.f32 %v2267, %v2275
        %v2284 = vsub.f32 %v2268, %v2278
        %v2285 = vsub.f32 %v2269, %v2281
        %v2286 = vmul.f32 %v2282, 1.442695
        %v2287 = vpow.pop %v2286
        %v2288 = vmul.f32 %v2283, 1.442695
        %v2289 = vpow.pop %v2288
        %v2290 = vmul.f32 %v2284, 1.442695
        %v2291 = vpow.pop %v2290
        %v2292 = vmul.f32 %v2285, 1.442695
        %v2293 = vpow.pop %v2292
        %v2294 = vsel %vm1329, %v2287, 0.0
        %2295 = vadd.xlane.f32.xlu0 %v2294
        %v2296 = vpop.xlane.xlu0 %2295
        %v2297 = vsel %vm1329, %v2289, 0.0
        %2298 = vadd.xlane.f32.xlu0 %v2297
        %v2299 = vpop.xlane.xlu0 %2298
        %v2300 = vsel %vm1329, %v2291, 0.0
        %2301 = vadd.xlane.f32.xlu0 %v2300
        %v2302 = vpop.xlane.xlu0 %2301
        %v2303 = vsel %vm1329, %v2293, 0.0
        %2304 = vadd.xlane.f32.xlu0 %v2303
        %v2305 = vpop.xlane.xlu0 %2304
        %v2306 = vrcp.pop %v2296
        %v2307 = vrcp.pop %v2299
        %v2308 = vrcp.pop %v2302
        %v2309 = vrcp.pop %v2305
        %v2310 = vmul.f32 %v2287, %v2306
        %v2311 = vmul.f32 %v2289, %v2307
        %v2312 = vmul.f32 %v2291, %v2308
        %v2313 = vmul.f32 %v2293, %v2309
        %v2314 = vpack.c.bf16 %v2310, %v2310
        %v2315 = vpack.c.bf16 %v2311, %v2311
        %v2316 = vpack.c.bf16 %v2312, %v2312
        %v2317 = vpack.c.bf16 %v2313, %v2313
        %v2319 = vsel %vm1329, %v2314, 0
        %v2322 = vsel %vm1465, %v2182, 0
        %2324 = vmatpush.bf16.msra.mxu0 0
        %2325 = vmatpush.bf16.msra.mxu0 0
        %2326 = vmatpush.bf16.msra.mxu0 0
        %2327 = vmatpush.bf16.msra.mxu0 0
        %2328 = vmatpush.bf16.msra.mxu0 0
        %2329 = vmatpush.bf16.msra.mxu0 0
        %2330 = vmatpush.bf16.msra.mxu0 0
        %2331 = vmatpush.bf16.msra.mxu0 %v2322
        %2332 = vmatmul.bf16.gmra.mxu0 %v2319
        %v2333 = vpop.f32.mrf.mxu0
        %v2334 = vadd.f32 0.0, %v2333
        %v2335 = vpop.f32.mrf.mxu0
        %2336 = vdwg.mxu0
        %v2338 = vsel %vm1329, %v2315, 0
        %v2341 = vsel %vm1465, %v2183, 0
        %2343 = vmatpush.bf16.msra.mxu0 0
        %2344 = vmatpush.bf16.msra.mxu0 0
        %2345 = vmatpush.bf16.msra.mxu0 0
        %2346 = vmatpush.bf16.msra.mxu0 0
        %2347 = vmatpush.bf16.msra.mxu0 0
        %2348 = vmatpush.bf16.msra.mxu0 0
        %2349 = vmatpush.bf16.msra.mxu0 0
        %2350 = vmatpush.bf16.msra.mxu0 %v2341
        %2351 = vmatmul.bf16.gmra.mxu0 %v2338
        %v2352 = vpop.f32.mrf.mxu0
        %v2353 = vadd.f32 0.0, %v2352
        %v2354 = vpop.f32.mrf.mxu0
        %2355 = vdwg.mxu0
        %v2357 = vsel %vm1329, %v2316, 0
        %v2360 = vsel %vm1465, %v2184, 0
        %2362 = vmatpush.bf16.msra.mxu0 0
        %2363 = vmatpush.bf16.msra.mxu0 0
        %2364 = vmatpush.bf16.msra.mxu0 0
        %2365 = vmatpush.bf16.msra.mxu0 0
        %2366 = vmatpush.bf16.msra.mxu0 0
        %2367 = vmatpush.bf16.msra.mxu0 0
        %2368 = vmatpush.bf16.msra.mxu0 0
        %2369 = vmatpush.bf16.msra.mxu0 %v2360
        %2370 = vmatmul.bf16.gmra.mxu0 %v2357
        %v2371 = vpop.f32.mrf.mxu0
        %v2372 = vadd.f32 0.0, %v2371
        %v2373 = vpop.f32.mrf.mxu0
        %2374 = vdwg.mxu0
        %v2376 = vsel %vm1329, %v2317, 0
        %v2379 = vsel %vm1465, %v2185, 0
        %2381 = vmatpush.bf16.msra.mxu0 0
        %2382 = vmatpush.bf16.msra.mxu0 0
        %2383 = vmatpush.bf16.msra.mxu0 0
        %2384 = vmatpush.bf16.msra.mxu0 0
        %2385 = vmatpush.bf16.msra.mxu0 0
        %2386 = vmatpush.bf16.msra.mxu0 0
        %2387 = vmatpush.bf16.msra.mxu0 0
        %2388 = vmatpush.bf16.msra.mxu0 %v2379
        %2389 = vmatmul.bf16.gmra.mxu0 %v2376
        %v2390 = vpop.f32.mrf.mxu0
        %v2391 = vadd.f32 0.0, %v2390
        %v2392 = vpop.f32.mrf.mxu0
        %2393 = vdwg.mxu0
        %v2394 = vrot.slane %v2372, 4
        %v2395 = vsel %vm963, %v2394, %v2334
        %v2396 = vrot.slane %v2334, 4
        %v2397 = vsel %vm963, %v2372, %v2396
        %v2399 = vunpack.c.l.s4 1983009808
        %v2400 = vunpack.c.0.s8 %v2399
        %v2401 = vperm.slane %v2395, %v2400
        %v2403 = vunpack.c.l.s4 1983009808
        %v2404 = vunpack.c.0.s8 %v2403
        %v2405 = vperm.slane %v2397, %v2404
        %v2406 = vrot.slane %v2391, 4
        %v2407 = vsel %vm963, %v2406, %v2353
        %v2408 = vrot.slane %v2353, 4
        %v2409 = vsel %vm963, %v2391, %v2408
        %v2411 = vunpack.c.l.s4 1983009808
        %v2412 = vunpack.c.0.s8 %v2411
        %v2413 = vperm.slane %v2407, %v2412
        %v2415 = vunpack.c.l.s4 1983009808
        %v2416 = vunpack.c.0.s8 %v2415
        %v2417 = vperm.slane %v2409, %v2416
        %v2418 = vrot.slane %v2413, 4
        %v2419 = vsel %vm963, %v2418, %v2401
        %v2420 = vrot.slane %v2401, 4
        %v2421 = vsel %vm963, %v2413, %v2420
        %v2423 = vunpack.c.l.s4 1934713408
        %v2424 = vunpack.c.0.s8 %v2423
        %v2425 = vperm.slane %v2419, %v2424
        %v2427 = vunpack.c.l.s4 1934713408
        %v2428 = vunpack.c.0.s8 %v2427
        %v2429 = vperm.slane %v2421, %v2428
        %v2430 = vrot.slane %v2417, 4
        %v2431 = vsel %vm963, %v2430, %v2405
        %v2432 = vrot.slane %v2405, 4
        %v2433 = vsel %vm963, %v2417, %v2432
        %v2435 = vunpack.c.l.s4 1934713408
        %v2436 = vunpack.c.0.s8 %v2435
        %v2437 = vperm.slane %v2431, %v2436
        %v2439 = vunpack.c.l.s4 1934713408
        %v2440 = vunpack.c.0.s8 %v2439
        %v2441 = vperm.slane %v2433, %v2440
        %v2442 = vrot.slane %v2425, 4
        %v2443 = vsel %vm963, 0.0, %v2442
        %v2444 = vrot.slane %v2429, 4
        %v2445 = vsel %vm963, 0.0, %v2444
        %v2446 = vrot.slane %v2437, 4
        %v2447 = vsel %vm963, 0.0, %v2446
        %v2448 = vrot.slane %v2441, 4
        %v2449 = vsel %vm963, 0.0, %v2448
        %v2450 = vsel %vm963, %v2444, %v2425
        %v2452 = vunpack.c.l.s4 1983009808
        %v2453 = vunpack.c.0.s8 %v2452
        %v2454 = vperm.slane %v2450, %v2453
        %v2455 = vrot.slane %v2445, 4
        %v2456 = vsel %vm963, %v2455, %v2443
        %v2458 = vunpack.c.l.s4 1983009808
        %v2459 = vunpack.c.0.s8 %v2458
        %v2460 = vperm.slane %v2456, %v2459
        %v2461 = vsel %vm963, %v2448, %v2437
        %v2463 = vunpack.c.l.s4 1983009808
        %v2464 = vunpack.c.0.s8 %v2463
        %v2465 = vperm.slane %v2461, %v2464
        %v2466 = vrot.slane %v2449, 4
        %v2467 = vsel %vm963, %v2466, %v2447
        %v2469 = vunpack.c.l.s4 1983009808
        %v2470 = vunpack.c.0.s8 %v2469
        %v2471 = vperm.slane %v2467, %v2470
        %v2472 = vrot.slane %v2460, 4
        %v2473 = vsel %vm963, %v2472, %v2454
        %v2474 = vrot.slane %v2454, 4
        %v2475 = vsel %vm963, %v2460, %v2474
        %v2477 = vunpack.c.l.s4 1934713408
        %v2478 = vunpack.c.0.s8 %v2477
        %v2479 = vperm.slane %v2473, %v2478
        %v2481 = vunpack.c.l.s4 1934713408
        %v2482 = vunpack.c.0.s8 %v2481
        %v2483 = vperm.slane %v2475, %v2482
        %v2484 = vrot.slane %v2471, 4
        %v2485 = vsel %vm963, %v2484, %v2465
        %v2486 = vrot.slane %v2465, 4
        %v2487 = vsel %vm963, %v2471, %v2486
        %v2489 = vunpack.c.l.s4 1934713408
        %v2490 = vunpack.c.0.s8 %v2489
        %v2491 = vperm.slane %v2485, %v2490
        %v2493 = vunpack.c.l.s4 1934713408
        %v2494 = vunpack.c.0.s8 %v2493
        %v2495 = vperm.slane %v2487, %v2494
        %v2496 = vrot.slane %v2491, 4
        %v2497 = vsel %vm963, %v2496, %v2479
        %v2498 = vrot.slane %v2479, 4
        %v2499 = vsel %vm963, %v2491, %v2498
        %v2500 = vrot.slane %v2495, 4
        %v2501 = vsel %vm963, %v2500, %v2483
        %v2502 = vrot.slane %v2483, 4
        %v2503 = vsel %vm963, %v2495, %v2502
        %2505 = vrot.lane.b32.xlu0 %v2499, 8
        %v2506 = vpop.permute.xlu0 %2505
        %2509 = vrot.lane.b32.xlu0 %v2501, 16
        %v2510 = vpop.permute.xlu0 %2509
        %2513 = vrot.lane.b32.xlu0 %v2503, 24
        %v2514 = vpop.permute.xlu0 %2513
        %v2516 = vsel %vm1329, %v2497, %v2506
        %v2517 = vsel %vm1662, %v2516, %v2510
        %v2518 = vsel %vm1664, %v2517, %v2514
        %v2519 = vpack.c.bf16 %v2518, %v2518
        %v2520 = vld [vmem:[#allocation19] sm:$0xf]
        %v2521 = vld [vmem:[#allocation19 + $0x4] sm:$0xf]
        %v2522 = vld [vmem:[#allocation19 + $0x8] sm:$0xf]
        %v2523 = vld [vmem:[#allocation19 + $0xc] sm:$0xf]
        %v2524 = vld [vmem:[#allocation20] sm:$0x1]
        %v2526 = vperm.slane %v2524, 0
        %v2532 = vunpack.c.l.b16 %v2520
        %v2533 = vunpack.c.l.b16 %v2521
        %v2534 = vunpack.c.l.b16 %v2522
        %v2535 = vunpack.c.l.b16 %v2523
        %v2536 = vpack.c.b16 %v2533, %v2532
        %v2537 = vpack.c.b16 %v2535, %v2534
        %v2541 = vsel %vm876, %v2519, 0
        %2543 = vmatpush.bf16.msra.mxu0 0
        %2544 = vmatpush.bf16.msra.mxu0 0
        %2545 = vmatpush.bf16.msra.mxu0 0
        %2546 = vmatpush.bf16.msra.mxu0 0
        %2547 = vmatpush.bf16.msra.mxu0 0
        %2548 = vmatpush.bf16.msra.mxu0 0
        %2549 = vmatpush.bf16.msra.mxu0 %v2537
        %2550 = vmatpush.bf16.msra.mxu0 %v2536
        %2551 = vmatmul.bf16.gmra.mxu0 %v2541
        %v2552 = vpop.f32.mrf.mxu0
        %v2553 = vadd.f32 %v2526, %v2552
        %v2554 = vpop.f32.mrf.mxu0
        %2555 = vdwg.mxu0
        %v2556 = vadd.f32 %v1703, %v2553
        %v2557 = vld [vmem:[#allocation5 + $0x4] sm:$0x1]
        %v2558 = vld [vmem:[#allocation5 + $0x5] sm:$0x1]
        %v2559 = vsel %vm876, %v2556, 0.0
        %2560 = vadd.xlane.f32.xlu0 %v2559
        %v2561 = vpop.xlane.xlu0 %2560
        %v2562 = vmul.f32 %v2561, %v886
        %v2563 = vmul.f32 %v2556, %v2556
        %v2564 = vsel %vm876, %v2563, 0.0
        %2565 = vadd.xlane.f32.xlu0 %v2564
        %v2566 = vpop.xlane.xlu0 %2565
        %v2567 = vmul.f32 %v2566, %v886
        %v2568 = vmul.f32 %v2562, %v2562
        %v2569 = vsub.f32 %v2567, %v2568
        %v2570 = vsub.f32 %v2556, %v2562
        %v2571 = vadd.f32 %v2569, 1e-05
        %v2572 = vrsqrt.pop %v2571
        %v2573 = vmul.f32 %v2572, %v2571
        %v2574 = vmul.f32 %v2573, %v2572
        %v2575 = vmul.f32 0.5, %v2574
        %v2576 = vsub.f32 1.5, %v2575
        %v2577 = vmul.f32 %v2572, %v2576
        %vm2578 = vweird.f32 %v2571
        %vm2579 = vweird.f32 %v2572
        %vm2580 = vmor %vm2578, %vm2579
        %v2581 = vsel %vm2580, %v2572, %v2577
        %v2582 = vmul.f32 %v2570, %v2581
        %v2583 = vperm.slane %v2557, 0
        %v2584 = vmul.f32 %v2582, %v2583
        %v2585 = vperm.slane %v2558, 0
        %v2586 = vadd.f32 %v2584, %v2585
        %v2587 = vpack.c.bf16 %v2586, %v2586
        %v2588 = vld [vmem:[#allocation22] sm:$0xf]
        %v2589 = vld [vmem:[#allocation22 + $0x4] sm:$0xf]
        %v2590 = vld [vmem:[#allocation22 + $0x8] sm:$0xf]
        %v2591 = vld [vmem:[#allocation22 + $0xc] sm:$0xf]
        %v2592 = vld [vmem:[#allocation23] sm:$0x1]
        %v2594 = vperm.slane %v2592, 0
        %v2600 = vunpack.c.l.b16 %v2588
        %v2601 = vunpack.c.l.b16 %v2589
        %v2602 = vunpack.c.l.b16 %v2590
        %v2603 = vunpack.c.l.b16 %v2591
        %v2604 = vpack.c.b16 %v2601, %v2600
        %v2605 = vpack.c.b16 %v2603, %v2602
        %v2609 = vsel %vm876, %v2587, 0
        %2611 = vmatpush.bf16.msra.mxu0 0
        %2612 = vmatpush.bf16.msra.mxu0 0
        %2613 = vmatpush.bf16.msra.mxu0 0
        %2614 = vmatpush.bf16.msra.mxu0 0
        %2615 = vmatpush.bf16.msra.mxu0 0
        %2616 = vmatpush.bf16.msra.mxu0 0
        %2617 = vmatpush.bf16.msra.mxu0 %v2605
        %2618 = vmatpush.bf16.msra.mxu0 %v2604
        %2619 = vmatmul.bf16.gmra.mxu0 %v2609
        %v2620 = vpop.f32.mrf.mxu0
        %v2621 = vadd.f32 %v2594, %v2620
        %v2622 = vpop.f32.mrf.mxu0
        %2623 = vdwg.mxu0
        %v2624 = vmax.f32 %v2621, 0.0
        %v2625 = vpack.c.bf16 %v2624, %v2624
        %v2626 = vld [vmem:[%s17] sm:$0xf]
        %v2627 = vld [vmem:[%s17 + $0x4] sm:$0xf]
        %v2628 = vld [vmem:[%s17 + $0x8] sm:$0xf]
        %v2629 = vld [vmem:[%s17 + $0xc] sm:$0xf]
        %v2630 = vld [vmem:[%s17 + $0x10] sm:$0xf]
        %v2631 = vld [vmem:[%s17 + $0x14] sm:$0xf]
        %v2632 = vld [vmem:[%s17 + $0x18] sm:$0xf]
        %v2633 = vld [vmem:[%s17 + $0x1c] sm:$0xf]
        %v2634 = vld [vmem:[%s18] sm:$0x1]
        %v2636 = vperm.slane %v2634, 0
        %v2646 = vunpack.c.l.b16 %v2626
        %v2647 = vunpack.c.l.b16 %v2627
        %v2648 = vunpack.c.l.b16 %v2628
        %v2649 = vunpack.c.l.b16 %v2629
        %v2650 = vunpack.c.l.b16 %v2630
        %v2651 = vunpack.c.l.b16 %v2631
        %v2652 = vunpack.c.l.b16 %v2632
        %v2653 = vunpack.c.l.b16 %v2633
        %v2654 = vpack.c.b16 %v2647, %v2646
        %v2655 = vpack.c.b16 %v2649, %v2648
        %v2656 = vpack.c.b16 %v2651, %v2650
        %v2657 = vpack.c.b16 %v2653, %v2652
        %vm2662 = vcmask 523264
        %v2664 = vsel %vm2662, %v2625, 0
        %2666 = vmatpush.bf16.msra.mxu0 0
        %2667 = vmatpush.bf16.msra.mxu0 0
        %2668 = vmatpush.bf16.msra.mxu0 0
        %2669 = vmatpush.bf16.msra.mxu0 0
        %2670 = vmatpush.bf16.msra.mxu0 %v2657
        %2671 = vmatpush.bf16.msra.mxu0 %v2656
        %2672 = vmatpush.bf16.msra.mxu0 %v2655
        %2673 = vmatpush.bf16.msra.mxu0 %v2654
        %2674 = vmatmul.bf16.gmra.mxu0 %v2664
        %v2675 = vpop.f32.mrf.mxu0
        %v2676 = vadd.f32 %v2636, %v2675
        %v2677 = vpop.f32.mrf.mxu0
        %2678 = vdwg.mxu0
        %v2679 = vadd.f32 %v2556, %v2676
        %2680 = vst.msk [vmem:[%s859] sm:$0xff] %vm876, %v2679
        %s2681 = sand.u32 %s470, 1
        %s2682 = scalar_lea.sflag [#allocation4], %s2681
        %s2683 = sand.u32 %s470, 1
        %s2684 = smul.addr %s2683, 8
        %s2685 = scalar_lea.vmem [#allocation25], %s2684
        // Predicated region
        $region153: #{tpu_custom_call.1} parent=95 // pred_check
          %p2686 = pneg %p480
        $region154: #{tpu_custom_call.1} parent=95 // pred_check_branch
          %2688 = sbr.rel (%p2686) target = $region156
        $region155: #{tpu_custom_call.1} parent=95 // pred_region
          %2690 = vsyncadd %s2682, 0
          %s2691 = smul.addr %s43, 8
          %s2692 = scalar_lea.hbm %s19, %s2691
          %s2694 = sshll.u32 %s2685, 4
          %s2695 = int_to_ptr.vmem [resolvable:$true] %s2694
          %s2696 = sshll.u32 %s2692, 4
          %s2697 = int_to_ptr.hbm [resolvable:$true] %s2696
          %2699 = dma.vmem_to_hbm [thread:$0]  %s2695, 128, %s2697, %s2682
        $region156: #{tpu_custom_call.1} parent=95 // pred_fallthru
          _
      $region96: #{tpu_custom_call.1} parent=5 // pred_fallthru
        _
      %p2700 = scmp.le.s32.totalorder 2, %s38
      // Predicated region
      $region157: #{tpu_custom_call.1} parent=5 // pred_check
        %p2701 = pneg %p2700
      $region158: #{tpu_custom_call.1} parent=5 // pred_check_branch
        %2703 = sbr.rel (%p2701) target = $region160
      $region159: #{tpu_custom_call.1} parent=5 // pred_region
        %s2704 = ssub.s32 %s38, 2
        // Predicated region
        $region161: #{tpu_custom_call.1} parent=159 // pred_check
          %p2705 = pneg %p486
        $region162: #{tpu_custom_call.1} parent=159 // pred_check_branch
          %2707 = sbr.rel (%p2705) target = $region164
        $region163: #{tpu_custom_call.1} parent=159 // pred_region
          %s2708 = sand.u32 %s471, 1
          %s2709 = scalar_lea.sflag [#allocation4], %s2708
          %s2710 = sand.u32 %s471, 1
          %s2711 = smul.addr %s2710, 8
          %s2712 = scalar_lea.vmem [#allocation25], %s2711
          %2714 = dma.done %s2709, 128
        $region164: #{tpu_custom_call.1} parent=159 // pred_fallthru
          _
      $region160: #{tpu_custom_call.1} parent=5 // pred_fallthru
        _
    $region6: #{tpu_custom_call.1} parent=1 // loop_footer
      %s42 = sadd.s32 1, %s38
    $region7: #{tpu_custom_call.1} parent=1 // loop_footer_branch
      %37 = sbr.rel target = $region3
    $region8: #{tpu_custom_call.1} parent=1 // loop_exit
      _
    %2715 = vsyncpa [#allocation3], 1
    %s2716 = scalar_lea.sflag [#allocation3], 1
    %2717 = vsyncpa %s2716, 1
    %2718 = vsyncpa [#allocation6], 1
    %2719 = vsyncpa [#allocation9], 1
    %2720 = vsyncpa [#allocation12], 1
    %2721 = vsyncpa [#allocation15], 1
    %2722 = vsyncpa [#allocation18], 1
    %2723 = vsyncpa [#allocation21], 1
    %2724 = vsyncpa [#allocation24], 1
    %2725 = vsyncpa [#allocation4], 1
    %s2726 = scalar_lea.sflag [#allocation4], 1
    %2727 = vsyncpa %s2726, 1

</llo_original>
